<compile_context>
chip_gen: v6e
topology: v6e:2x2x1
jax: 0.10.0
libtpu: 0.0.40
codegen_flags: <defaults>
</compile_context>

<pallas_src>
import jax
import jax.numpy as jnp
from jax.experimental import pallas as pl
from jax.experimental.pallas import tpu as pltpu


def encoder_pool_kernel(ids_ref, kbias_ref, poolw_ref, pos_ref, seg_bias_ref,
                        tok_emb_ref,
                        wqkv_ref, bqkv_ref, bo_ref,
                        ln1_g_ref, ln1_b_ref,
                        w1_ref, b1_ref, w2_ref, b2_ref,
                        ln2_g_ref, ln2_b_ref,
                        out_ref):
    """One grid step processes TB sequences folded into N = TB*S rows.

    ids_ref     : [N, 1]  int32  token ids of this tile
    kbias_ref   : [1, 1, N] f32  key-padding additive bias (0 valid / -1e9 padded)
    poolw_ref   : [N, 1]  f32    per-row masked-mean weight (mask / token count)
    pos_ref     : [N, H]  f32    positional-embedding tile (call-constant)
    seg_bias_ref: [N, N]  f32    0 within a sequence, -1e9 across (call-constant)
    tok_emb_ref : [V, H]  f32    vocab embedding table (VMEM-resident)
    out_ref     : [TB, H] f32    masked-mean sentence embeddings (lane-dense)
    """
    TB, H = out_ref.shape
    N = pos_ref.shape[0]
    S = N // TB
    V = tok_emb_ref.shape[0]

    # --- in-kernel embedding lookup: one-hot [N,V] @ tok_emb [V,H] + positional tile ---
    one_hot = (ids_ref[...] == jax.lax.broadcasted_iota(jnp.int32, (N, V), 1)
               ).astype(jnp.float32)
    x = jnp.dot(one_hot, tok_emb_ref[...], preferred_element_type=jnp.float32) + pos_ref[...]
    x_bf = x.astype(jnp.bfloat16)

    # --- fused QKV projection (1/sqrt(H) folded into Q slice, Wo folded into V slice) ---
    qkv = jnp.dot(x_bf, wqkv_ref[...], preferred_element_type=jnp.float32) + bqkv_ref[...]
    q = qkv[:, :H].astype(jnp.bfloat16)
    k = qkv[:, H:2 * H].astype(jnp.bfloat16)
    v = qkv[:, 2 * H:].astype(jnp.bfloat16)          # already projected through Wo

    # --- block-diagonal (per-sequence) attention over the whole tile ---
    bias = seg_bias_ref[...] + kbias_ref[0]           # [N, N] + [1, N]
    scores = jnp.dot(q, k.T, preferred_element_type=jnp.float32) + bias
    scores = scores - jnp.max(scores, axis=-1, keepdims=True)
    p = jnp.exp(scores)
    p = p * pl.reciprocal(jnp.sum(p, axis=-1, keepdims=True), approx=True)
    attn = jnp.dot(p.astype(jnp.bfloat16), v,
                   preferred_element_type=jnp.float32) + bo_ref[...]

    def layer_norm(t, g, b):
        mu = jnp.mean(t, axis=-1, keepdims=True)
        var = jnp.mean(t * t, axis=-1, keepdims=True) - mu * mu
        return (t - mu) * jax.lax.rsqrt(var + 1e-5) * g + b

    h = layer_norm(x + attn, ln1_g_ref[...], ln1_b_ref[...])

    # --- feed-forward ---
    ff = jnp.dot(h.astype(jnp.bfloat16), w1_ref[...],
                 preferred_element_type=jnp.float32) + b1_ref[...]
    # TODO(synk): torch nn.GELU defaults to exact erf; tanh approximation used here.
    ff = jax.nn.gelu(ff, approximate=True)
    ff = jnp.dot(ff.astype(jnp.bfloat16), w2_ref[...],
                 preferred_element_type=jnp.float32) + b2_ref[...]
    h2 = layer_norm(h + ff, ln2_g_ref[...], ln2_b_ref[...])

    # --- masked-mean pooling: per-row weight, sublane-only reshape, sum over S ---
    weighted = h2 * poolw_ref[...]                    # [N, H] * [N, 1]
    out_ref[...] = jnp.sum(weighted.reshape(TB, S, H), axis=1)


def make_params(key, vocab=32, max_seq=8, hidden=128, ffn=256, num_classes=8):
    keys = jax.random.split(key, 16)
    s = 0.02
    return {
        "tok_emb": jax.random.normal(keys[0], (vocab, hidden), jnp.float32) * s,
        "pos_emb": jax.random.normal(keys[1], (max_seq, hidden), jnp.float32) * s,
        "wq": jax.random.normal(keys[2], (hidden, hidden), jnp.float32) * s,
        "bq": jnp.zeros((1, hidden), jnp.float32),
        "wk": jax.random.normal(keys[3], (hidden, hidden), jnp.float32) * s,
        "bk": jnp.zeros((1, hidden), jnp.float32),
        "wv": jax.random.normal(keys[4], (hidden, hidden), jnp.float32) * s,
        "bv": jnp.zeros((1, hidden), jnp.float32),
        "wo": jax.random.normal(keys[5], (hidden, hidden), jnp.float32) * s,
        "bo": jnp.zeros((1, hidden), jnp.float32),
        "ln1_g": jnp.ones((1, hidden), jnp.float32),
        "ln1_b": jnp.zeros((1, hidden), jnp.float32),
        "w1": jax.random.normal(keys[6], (hidden, ffn), jnp.float32) * s,
        "b1": jnp.zeros((1, ffn), jnp.float32),
        "w2": jax.random.normal(keys[7], (ffn, hidden), jnp.float32) * s,
        "b2": jnp.zeros((1, hidden), jnp.float32),
        "ln2_g": jnp.ones((1, hidden), jnp.float32),
        "ln2_b": jnp.zeros((1, hidden), jnp.float32),
        "wh": jax.random.normal(keys[8], (hidden, num_classes), jnp.float32) * s,
        "bh": jnp.zeros((1, num_classes), jnp.float32),
    }


def pack_params(params, matmul_dtype=jnp.bfloat16):
    """One-time weight prep: fuse QKV, fold the 1/sqrt(H) attention scale into Q and the
    output projection Wo into V (single-head), cast matmul weights to bf16."""
    H = params["wq"].shape[0]
    scale = 1.0 / float(H) ** 0.5
    wv_o = params["wv"] @ params["wo"]                 # [H, H]  (f32, then rounded once)
    bv_o = params["bv"] @ params["wo"]                 # [1, H]
    return {
        "tok_emb": params["tok_emb"],                  # f32 (exact gather via one-hot)
        "pos_emb": params["pos_emb"],
        "wqkv": jnp.concatenate([params["wq"] * scale, params["wk"], wv_o],
                                axis=1).astype(matmul_dtype),          # [H, 3H]
        "bqkv": jnp.concatenate([params["bq"] * scale, params["bk"], bv_o],
                                axis=1),                               # [1, 3H] f32
        "bo": params["bo"],
        "ln1_g": params["ln1_g"], "ln1_b": params["ln1_b"],
        "w1": params["w1"].astype(matmul_dtype), "b1": params["b1"],
        "w2": params["w2"].astype(matmul_dtype), "b2": params["b2"],
        "ln2_g": params["ln2_g"], "ln2_b": params["ln2_b"],
        "wh": params["wh"], "bh": params["bh"],
    }


def sentence_transformer_with_head(input_ids, attention_mask, packed, *, rows_per_tile=256):
    """rows_per_tile: target matmul M per grid step.  Keep 256 on v5e/v6e (sweep up to 512
    on v6e); on v7x pick TB so G = ceil(B/TB) is >= 2 (ideally a multiple of 2) so the
    "parallel" grid axis can shard across both TensorCores."""
    B, S = input_ids.shape
    H = packed["pos_emb"].shape[1]

    TB = max(1, rows_per_tile // S)       # sequences folded per grid step
    TB = min(TB, B)                       # don't pad far past the actual batch
    G = -(-B // TB)                       # number of grid steps
    Bp = G * TB
    N = TB * S

    ids = input_ids.astype(jnp.int32)
    mask_f = attention_mask.astype(jnp.float32)
    pad = Bp - B
    if pad:
        ids = jnp.concatenate([ids, jnp.zeros((pad, S), jnp.int32)], axis=0)
        mask_f = jnp.concatenate([mask_f, jnp.zeros((pad, S), jnp.float32)], axis=0)

    # Per-tile data inputs (tiny): ids / key-padding bias / masked-mean pool weights.
    ids_col = ids.reshape(Bp * S, 1)                                     # [G*N, 1]
    kbias_rows = ((mask_f - 1.0) * 1e9).reshape(G, 1, N)                 # [G, 1, N]
    counts = jnp.maximum(jnp.sum(mask_f, axis=1, keepdims=True), 1.0)    # [Bp, 1]
    poolw_col = (mask_f / counts).reshape(Bp * S, 1)                     # [G*N, 1]

    # Call-constant helpers: positional tile and block-diagonal segment bias.
    pos_tile = jnp.tile(packed["pos_emb"][:S], (TB, 1))                  # [N, H] f32
    seg = jnp.repeat(jnp.arange(TB, dtype=jnp.int32), S)                 # [N]
    seg_bias = jnp.where(seg[:, None] == seg[None, :], 0.0, -1e9
                         ).astype(jnp.float32)                           # [N, N]

    weight_names = ("tok_emb", "wqkv", "bqkv", "bo", "ln1_g", "ln1_b",
                    "w1", "b1", "w2", "b2", "ln2_g", "ln2_b")
    weights = [packed[n] for n in weight_names]

    def const_spec(shape):
        nd = len(shape)
        # Constant index map -> same (VMEM-resident) block every step.  If H/FFN are ever
        # scaled up (esp. on v7x's 64 MiB VMEM), add pipeline_mode=pl.Buffered(1) here and
        # set vmem_limit_bytes explicitly to avoid double-buffering the resident weights.
        return pl.BlockSpec(shape, lambda b, _nd=nd: (0,) * _nd)

    pooled = pl.pallas_call(
        encoder_pool_kernel,
        out_shape=jax.ShapeDtypeStruct((Bp, H), jnp.float32),
        grid_spec=pltpu.PrefetchScalarGridSpec(
            num_scalar_prefetch=0,
            grid=(G,),
            in_specs=[pl.BlockSpec((N, 1), lambda b: (b, 0)),            # ids
                      pl.BlockSpec((1, 1, N), lambda b: (b, 0, 0)),      # key-padding bias
                      pl.BlockSpec((N, 1), lambda b: (b, 0)),            # pool weights
                      const_spec(pos_tile.shape),
                      const_spec(seg_bias.shape)]
                     + [const_spec(w.shape) for w in weights],
            out_specs=pl.BlockSpec((TB, H), lambda b: (b, 0)),
        ),
        compiler_params=pltpu.CompilerParams(dimension_semantics=("parallel",)),
    )(ids_col, kbias_rows, poolw_col, pos_tile, seg_bias, *weights)

    # ClassificationHead: tiny Linear(H, C=8) kept as XLA glue so the kernel output stays
    # lane-dense [TB, 128] (C=8 would force masked partial stores + an 8-lane MXU output).
    logits = pooled[:B] @ packed["wh"] + packed["bh"]
    return logits


if __name__ == "__main__":
    key = jax.random.PRNGKey(0)
    k_param, k_ids = jax.random.split(key)

    B, S, VOCAB, H, FFN, C = 2, 8, 32, 128, 256, 8
    params = make_params(k_param, vocab=VOCAB, max_seq=S, hidden=H, ffn=FFN, num_classes=C)
    packed = pack_params(params)

    input_ids = jax.random.randint(k_ids, (B, S), 0, VOCAB, dtype=jnp.int32)
    # First sequence fully valid, second sequence has 3 padding tokens.
    attention_mask = jnp.array([[1, 1, 1, 1, 1, 1, 1, 1],
                                [1, 1, 1, 1, 1, 0, 0, 0]], dtype=jnp.int32)

    logits = sentence_transformer_with_head(input_ids, attention_mask, packed)
    jax.block_until_ready(logits)
    assert logits.shape == (B, C) and logits.dtype == jnp.float32
    assert bool(jnp.all(jnp.isfinite(logits)))
    print("KERNEL_OK")
</pallas_src>

<mosaic_0001>
module attributes {stable_mosaic.version = 11 : i64} {
  func.func @encoder_pool_kernel(%arg0: i32, %arg1: memref<16x1xi32, #tpu.memory_space<vmem>>, %arg2: memref<1x1x16xf32, #tpu.memory_space<vmem>>, %arg3: memref<16x1xf32, #tpu.memory_space<vmem>>, %arg4: memref<16x128xf32, #tpu.memory_space<vmem>>, %arg5: memref<16x16xf32, #tpu.memory_space<vmem>>, %arg6: memref<32x128xf32, #tpu.memory_space<vmem>>, %arg7: memref<128x384xbf16, #tpu.memory_space<vmem>>, %arg8: memref<1x384xf32, #tpu.memory_space<vmem>>, %arg9: memref<1x128xf32, #tpu.memory_space<vmem>>, %arg10: memref<1x128xf32, #tpu.memory_space<vmem>>, %arg11: memref<1x128xf32, #tpu.memory_space<vmem>>, %arg12: memref<128x256xbf16, #tpu.memory_space<vmem>>, %arg13: memref<1x256xf32, #tpu.memory_space<vmem>>, %arg14: memref<256x128xbf16, #tpu.memory_space<vmem>>, %arg15: memref<1x128xf32, #tpu.memory_space<vmem>>, %arg16: memref<1x128xf32, #tpu.memory_space<vmem>>, %arg17: memref<1x128xf32, #tpu.memory_space<vmem>>, %arg18: memref<2x128xf32, #tpu.memory_space<vmem>>) attributes {dimension_semantics = [#tpu.dimension_semantics<parallel>], iteration_bounds = array<i64: 1>, scalar_prefetch = 0 : i64, scratch_operands = 0 : i64, tpu.core_type = #tpu.core_type<tc>, window_params = [{transform_indices = @transform_0, window_bounds = array<i64: 16, 1>}, {transform_indices = @transform_1, window_bounds = array<i64: 1, 1, 16>}, {transform_indices = @transform_2, window_bounds = array<i64: 16, 1>}, {pipeline_mode = #tpu.pipeline_mode<synchronous>, transform_indices = @transform_3, window_bounds = array<i64: 16, 128>}, {pipeline_mode = #tpu.pipeline_mode<synchronous>, transform_indices = @transform_4, window_bounds = array<i64: 16, 16>}, {pipeline_mode = #tpu.pipeline_mode<synchronous>, transform_indices = @transform_5, window_bounds = array<i64: 32, 128>}, {pipeline_mode = #tpu.pipeline_mode<synchronous>, transform_indices = @transform_6, window_bounds = array<i64: 128, 384>}, {pipeline_mode = #tpu.pipeline_mode<synchronous>, transform_indices = @transform_7, window_bounds = array<i64: 1, 384>}, {pipeline_mode = #tpu.pipeline_mode<synchronous>, transform_indices = @transform_8, window_bounds = array<i64: 1, 128>}, {pipeline_mode = #tpu.pipeline_mode<synchronous>, transform_indices = @transform_9, window_bounds = array<i64: 1, 128>}, {pipeline_mode = #tpu.pipeline_mode<synchronous>, transform_indices = @transform_10, window_bounds = array<i64: 1, 128>}, {pipeline_mode = #tpu.pipeline_mode<synchronous>, transform_indices = @transform_11, window_bounds = array<i64: 128, 256>}, {pipeline_mode = #tpu.pipeline_mode<synchronous>, transform_indices = @transform_12, window_bounds = array<i64: 1, 256>}, {pipeline_mode = #tpu.pipeline_mode<synchronous>, transform_indices = @transform_13, window_bounds = array<i64: 256, 128>}, {pipeline_mode = #tpu.pipeline_mode<synchronous>, transform_indices = @transform_14, window_bounds = array<i64: 1, 128>}, {pipeline_mode = #tpu.pipeline_mode<synchronous>, transform_indices = @transform_15, window_bounds = array<i64: 1, 128>}, {pipeline_mode = #tpu.pipeline_mode<synchronous>, transform_indices = @transform_16, window_bounds = array<i64: 1, 128>}, {transform_indices = @transform_17, window_bounds = array<i64: 2, 128>}]} {
    %c0 = arith.constant 0 : index
    %c0_0 = arith.constant 0 : index
    %0 = vector.load %arg1[%c0, %c0_0] : memref<16x1xi32, #tpu.memory_space<vmem>>, vector<16x1xi32>
    %1 = tpu.iota {dimensions = array<i32: 1>} : vector<16x32xi32>
    %2 = vector.broadcast %0 : vector<16x1xi32> to vector<16x32xi32>
    %3 = arith.cmpi eq, %2, %1 : vector<16x32xi32>
    %4 = arith.extui %3 : vector<16x32xi1> to vector<16x32xi32>
    %5 = arith.sitofp %4 : vector<16x32xi32> to vector<16x32xf32>
    %c0_1 = arith.constant 0 : index
    %c0_2 = arith.constant 0 : index
    %6 = vector.load %arg6[%c0_1, %c0_2] : memref<32x128xf32, #tpu.memory_space<vmem>>, vector<32x128xf32>
    %cst = arith.constant dense<0.000000e+00> : vector<16x128xf32>
    %7 = tpu.matmul %5, %6, %cst {dimension_numbers = #tpu.dot_dimension_numbers<[1], [0], [0], [1], [0, 0, 1, 1], [], []>} : vector<16x32xf32>, vector<32x128xf32>, vector<16x128xf32> -> vector<16x128xf32>
    %c0_3 = arith.constant 0 : index
    %c0_4 = arith.constant 0 : index
    %8 = vector.load %arg4[%c0_3, %c0_4] : memref<16x128xf32, #tpu.memory_space<vmem>>, vector<16x128xf32>
    %9 = arith.addf %7, %8 : vector<16x128xf32>
    %10 = arith.truncf %9 : vector<16x128xf32> to vector<16x128xbf16>
    %c0_5 = arith.constant 0 : index
    %c0_6 = arith.constant 0 : index
    %11 = vector.load %arg7[%c0_5, %c0_6] : memref<128x384xbf16, #tpu.memory_space<vmem>>, vector<128x384xbf16>
    %cst_7 = arith.constant dense<0.000000e+00> : vector<16x384xf32>
    %12 = tpu.matmul %10, %11, %cst_7 {dimension_numbers = #tpu.dot_dimension_numbers<[1], [0], [0], [1], [0, 0, 1, 1], [], []>} : vector<16x128xbf16>, vector<128x384xbf16>, vector<16x384xf32> -> vector<16x384xf32>
    %c0_8 = arith.constant 0 : index
    %c0_9 = arith.constant 0 : index
    %13 = vector.load %arg8[%c0_8, %c0_9] : memref<1x384xf32, #tpu.memory_space<vmem>>, vector<1x384xf32>
    %14 = vector.broadcast %13 : vector<1x384xf32> to vector<16x384xf32>
    %15 = arith.addf %12, %14 : vector<16x384xf32>
    %16 = vector.extract_strided_slice %15 {offsets = [0, 0], sizes = [16, 128], strides = [1, 1]} : vector<16x384xf32> to vector<16x128xf32>
    %17 = arith.truncf %16 : vector<16x128xf32> to vector<16x128xbf16>
    %18 = vector.extract_strided_slice %15 {offsets = [0, 128], sizes = [16, 128], strides = [1, 1]} : vector<16x384xf32> to vector<16x128xf32>
    %19 = arith.truncf %18 : vector<16x128xf32> to vector<16x128xbf16>
    %20 = vector.extract_strided_slice %15 {offsets = [0, 256], sizes = [16, 128], strides = [1, 1]} : vector<16x384xf32> to vector<16x128xf32>
    %21 = arith.truncf %20 : vector<16x128xf32> to vector<16x128xbf16>
    %c0_10 = arith.constant 0 : index
    %c0_11 = arith.constant 0 : index
    %22 = vector.load %arg5[%c0_10, %c0_11] : memref<16x16xf32, #tpu.memory_space<vmem>>, vector<16x16xf32>
    %c0_12 = arith.constant 0 : index
    %c0_13 = arith.constant 0 : index
    %c0_14 = arith.constant 0 : index
    %23 = vector.load %arg2[%c0_12, %c0_13, %c0_14] : memref<1x1x16xf32, #tpu.memory_space<vmem>>, vector<1x1x16xf32>
    %24 = vector.shape_cast %23 : vector<1x1x16xf32> to vector<1x16xf32>
    %25 = vector.broadcast %24 : vector<1x16xf32> to vector<16x16xf32>
    %26 = arith.addf %22, %25 : vector<16x16xf32>
    %27 = tpu.transpose %19, [1, 0] : vector<16x128xbf16> -> vector<128x16xbf16>
    %cst_15 = arith.constant dense<0.000000e+00> : vector<16x16xf32>
    %28 = tpu.matmul %17, %27, %cst_15 {dimension_numbers = #tpu.dot_dimension_numbers<[1], [0], [0], [1], [0, 0, 1, 1], [], []>} : vector<16x128xbf16>, vector<128x16xbf16>, vector<16x16xf32> -> vector<16x16xf32>
    %29 = arith.addf %28, %26 : vector<16x16xf32>
    %cst_16 = arith.constant dense<0xFF800000> : vector<16xf32>
    %30 = vector.multi_reduction <maximumf>, %29, %cst_16 [1] : vector<16x16xf32> to vector<16xf32>
    %31 = vector.shape_cast %30 : vector<16xf32> to vector<16x1xf32>
    %32 = vector.broadcast %31 : vector<16x1xf32> to vector<16x16xf32>
    %33 = arith.subf %29, %32 : vector<16x16xf32>
    %34 = math.exp %33 : vector<16x16xf32>
    %cst_17 = arith.constant dense<0.000000e+00> : vector<16xf32>
    %35 = vector.multi_reduction <add>, %34, %cst_17 [1] : vector<16x16xf32> to vector<16xf32>
    %36 = vector.shape_cast %35 : vector<16xf32> to vector<16x1xf32>
    %37 = tpu.reciprocal %36 {approx = true} : vector<16x1xf32> -> vector<16x1xf32>
    %38 = vector.broadcast %37 : vector<16x1xf32> to vector<16x16xf32>
    %39 = arith.mulf %34, %38 : vector<16x16xf32>
    %40 = arith.truncf %39 : vector<16x16xf32> to vector<16x16xbf16>
    %cst_18 = arith.constant dense<0.000000e+00> : vector<16x128xf32>
    %41 = tpu.matmul %40, %21, %cst_18 {dimension_numbers = #tpu.dot_dimension_numbers<[1], [0], [0], [1], [0, 0, 1, 1], [], []>} : vector<16x16xbf16>, vector<16x128xbf16>, vector<16x128xf32> -> vector<16x128xf32>
    %c0_19 = arith.constant 0 : index
    %c0_20 = arith.constant 0 : index
    %42 = vector.load %arg9[%c0_19, %c0_20] : memref<1x128xf32, #tpu.memory_space<vmem>>, vector<1x128xf32>
    %43 = vector.broadcast %42 : vector<1x128xf32> to vector<16x128xf32>
    %44 = arith.addf %41, %43 : vector<16x128xf32>
    %45 = arith.addf %9, %44 : vector<16x128xf32>
    %c0_21 = arith.constant 0 : index
    %c0_22 = arith.constant 0 : index
    %46 = vector.load %arg10[%c0_21, %c0_22] : memref<1x128xf32, #tpu.memory_space<vmem>>, vector<1x128xf32>
    %c0_23 = arith.constant 0 : index
    %c0_24 = arith.constant 0 : index
    %47 = vector.load %arg11[%c0_23, %c0_24] : memref<1x128xf32, #tpu.memory_space<vmem>>, vector<1x128xf32>
    %cst_25 = arith.constant dense<0.000000e+00> : vector<16xf32>
    %48 = vector.multi_reduction <add>, %45, %cst_25 [1] : vector<16x128xf32> to vector<16xf32>
    %49 = vector.shape_cast %48 : vector<16xf32> to vector<16x1xf32>
    %cst_26 = arith.constant 1.280000e+02 : f32
    %50 = vector.broadcast %cst_26 : f32 to vector<16x1xf32>
    %51 = arith.divf %49, %50 : vector<16x1xf32>
    %52 = arith.mulf %45, %45 : vector<16x128xf32>
    %cst_27 = arith.constant dense<0.000000e+00> : vector<16xf32>
    %53 = vector.multi_reduction <add>, %52, %cst_27 [1] : vector<16x128xf32> to vector<16xf32>
    %54 = vector.shape_cast %53 : vector<16xf32> to vector<16x1xf32>
    %cst_28 = arith.constant 1.280000e+02 : f32
    %55 = vector.broadcast %cst_28 : f32 to vector<16x1xf32>
    %56 = arith.divf %54, %55 : vector<16x1xf32>
    %57 = arith.mulf %51, %51 : vector<16x1xf32>
    %58 = arith.subf %56, %57 : vector<16x1xf32>
    %59 = vector.broadcast %51 : vector<16x1xf32> to vector<16x128xf32>
    %60 = arith.subf %45, %59 : vector<16x128xf32>
    %cst_29 = arith.constant 9.99999974E-6 : f32
    %61 = vector.broadcast %cst_29 : f32 to vector<16x1xf32>
    %62 = arith.addf %58, %61 : vector<16x1xf32>
    %63 = math.rsqrt %62 : vector<16x1xf32>
    %64 = vector.broadcast %63 : vector<16x1xf32> to vector<16x128xf32>
    %65 = arith.mulf %60, %64 : vector<16x128xf32>
    %66 = vector.broadcast %46 : vector<1x128xf32> to vector<16x128xf32>
    %67 = arith.mulf %65, %66 : vector<16x128xf32>
    %68 = vector.broadcast %47 : vector<1x128xf32> to vector<16x128xf32>
    %69 = arith.addf %67, %68 : vector<16x128xf32>
    %70 = arith.truncf %69 : vector<16x128xf32> to vector<16x128xbf16>
    %c0_30 = arith.constant 0 : index
    %c0_31 = arith.constant 0 : index
    %71 = vector.load %arg12[%c0_30, %c0_31] : memref<128x256xbf16, #tpu.memory_space<vmem>>, vector<128x256xbf16>
    %cst_32 = arith.constant dense<0.000000e+00> : vector<16x256xf32>
    %72 = tpu.matmul %70, %71, %cst_32 {dimension_numbers = #tpu.dot_dimension_numbers<[1], [0], [0], [1], [0, 0, 1, 1], [], []>} : vector<16x128xbf16>, vector<128x256xbf16>, vector<16x256xf32> -> vector<16x256xf32>
    %c0_33 = arith.constant 0 : index
    %c0_34 = arith.constant 0 : index
    %73 = vector.load %arg13[%c0_33, %c0_34] : memref<1x256xf32, #tpu.memory_space<vmem>>, vector<1x256xf32>
    %74 = vector.broadcast %73 : vector<1x256xf32> to vector<16x256xf32>
    %75 = arith.addf %72, %74 : vector<16x256xf32>
    %76 = arith.mulf %75, %75 : vector<16x256xf32>
    %77 = arith.mulf %75, %76 : vector<16x256xf32>
    %cst_35 = arith.constant 4.471500e-02 : f32
    %78 = vector.broadcast %cst_35 : f32 to vector<16x256xf32>
    %79 = arith.mulf %78, %77 : vector<16x256xf32>
    %80 = arith.addf %75, %79 : vector<16x256xf32>
    %cst_36 = arith.constant 0.797884583 : f32
    %81 = vector.broadcast %cst_36 : f32 to vector<16x256xf32>
    %82 = arith.mulf %81, %80 : vector<16x256xf32>
    %83 = math.tanh %82 : vector<16x256xf32>
    %cst_37 = arith.constant 1.000000e+00 : f32
    %84 = vector.broadcast %cst_37 : f32 to vector<16x256xf32>
    %85 = arith.addf %84, %83 : vector<16x256xf32>
    %cst_38 = arith.constant 5.000000e-01 : f32
    %86 = vector.broadcast %cst_38 : f32 to vector<16x256xf32>
    %87 = arith.mulf %86, %85 : vector<16x256xf32>
    %88 = arith.mulf %75, %87 : vector<16x256xf32>
    %89 = arith.truncf %88 : vector<16x256xf32> to vector<16x256xbf16>
    %c0_39 = arith.constant 0 : index
    %c0_40 = arith.constant 0 : index
    %90 = vector.load %arg14[%c0_39, %c0_40] : memref<256x128xbf16, #tpu.memory_space<vmem>>, vector<256x128xbf16>
    %cst_41 = arith.constant dense<0.000000e+00> : vector<16x128xf32>
    %91 = tpu.matmul %89, %90, %cst_41 {dimension_numbers = #tpu.dot_dimension_numbers<[1], [0], [0], [1], [0, 0, 1, 1], [], []>} : vector<16x256xbf16>, vector<256x128xbf16>, vector<16x128xf32> -> vector<16x128xf32>
    %c0_42 = arith.constant 0 : index
    %c0_43 = arith.constant 0 : index
    %92 = vector.load %arg15[%c0_42, %c0_43] : memref<1x128xf32, #tpu.memory_space<vmem>>, vector<1x128xf32>
    %93 = vector.broadcast %92 : vector<1x128xf32> to vector<16x128xf32>
    %94 = arith.addf %91, %93 : vector<16x128xf32>
    %95 = arith.addf %69, %94 : vector<16x128xf32>
    %c0_44 = arith.constant 0 : index
    %c0_45 = arith.constant 0 : index
    %96 = vector.load %arg16[%c0_44, %c0_45] : memref<1x128xf32, #tpu.memory_space<vmem>>, vector<1x128xf32>
    %c0_46 = arith.constant 0 : index
    %c0_47 = arith.constant 0 : index
    %97 = vector.load %arg17[%c0_46, %c0_47] : memref<1x128xf32, #tpu.memory_space<vmem>>, vector<1x128xf32>
    %cst_48 = arith.constant dense<0.000000e+00> : vector<16xf32>
    %98 = vector.multi_reduction <add>, %95, %cst_48 [1] : vector<16x128xf32> to vector<16xf32>
    %99 = vector.shape_cast %98 : vector<16xf32> to vector<16x1xf32>
    %cst_49 = arith.constant 1.280000e+02 : f32
    %100 = vector.broadcast %cst_49 : f32 to vector<16x1xf32>
    %101 = arith.divf %99, %100 : vector<16x1xf32>
    %102 = arith.mulf %95, %95 : vector<16x128xf32>
    %cst_50 = arith.constant dense<0.000000e+00> : vector<16xf32>
    %103 = vector.multi_reduction <add>, %102, %cst_50 [1] : vector<16x128xf32> to vector<16xf32>
    %104 = vector.shape_cast %103 : vector<16xf32> to vector<16x1xf32>
    %cst_51 = arith.constant 1.280000e+02 : f32
    %105 = vector.broadcast %cst_51 : f32 to vector<16x1xf32>
    %106 = arith.divf %104, %105 : vector<16x1xf32>
    %107 = arith.mulf %101, %101 : vector<16x1xf32>
    %108 = arith.subf %106, %107 : vector<16x1xf32>
    %109 = vector.broadcast %101 : vector<16x1xf32> to vector<16x128xf32>
    %110 = arith.subf %95, %109 : vector<16x128xf32>
    %cst_52 = arith.constant 9.99999974E-6 : f32
    %111 = vector.broadcast %cst_52 : f32 to vector<16x1xf32>
    %112 = arith.addf %108, %111 : vector<16x1xf32>
    %113 = math.rsqrt %112 : vector<16x1xf32>
    %114 = vector.broadcast %113 : vector<16x1xf32> to vector<16x128xf32>
    %115 = arith.mulf %110, %114 : vector<16x128xf32>
    %116 = vector.broadcast %96 : vector<1x128xf32> to vector<16x128xf32>
    %117 = arith.mulf %115, %116 : vector<16x128xf32>
    %118 = vector.broadcast %97 : vector<1x128xf32> to vector<16x128xf32>
    %119 = arith.addf %117, %118 : vector<16x128xf32>
    %c0_53 = arith.constant 0 : index
    %c0_54 = arith.constant 0 : index
    %120 = vector.load %arg3[%c0_53, %c0_54] : memref<16x1xf32, #tpu.memory_space<vmem>>, vector<16x1xf32>
    %121 = vector.broadcast %120 : vector<16x1xf32> to vector<16x128xf32>
    %122 = arith.mulf %119, %121 : vector<16x128xf32>
    %123 = vector.shape_cast %122 : vector<16x128xf32> to vector<2x8x128xf32>
    %cst_55 = arith.constant dense<0.000000e+00> : vector<2x128xf32>
    %124 = vector.multi_reduction <add>, %123, %cst_55 [1] : vector<2x8x128xf32> to vector<2x128xf32>
    %c0_56 = arith.constant 0 : index
    %c0_57 = arith.constant 0 : index
    %125 = vector.load %arg18[%c0_56, %c0_57] : memref<2x128xf32, #tpu.memory_space<vmem>>, vector<2x128xf32>
    tpu.vector_store %arg18[%c0_56, %c0_57], %124 {strides = array<i32>} : memref<2x128xf32, #tpu.memory_space<vmem>>, vector<2x128xf32>,
    return
  }
  func.func @transform_0(%arg0: i32) -> (i32, i32) {
    %c0_i32 = arith.constant 0 : i32
    %c0_i32_0 = arith.constant 0 : i32
    return %arg0, %c0_i32 : i32, i32
  }
  func.func @transform_1(%arg0: i32) -> (i32, i32, i32) {
    %c0_i32 = arith.constant 0 : i32
    %c0_i32_0 = arith.constant 0 : i32
    %c0_i32_1 = arith.constant 0 : i32
    return %arg0, %c0_i32, %c0_i32_0 : i32, i32, i32
  }
  func.func @transform_2(%arg0: i32) -> (i32, i32) {
    %c0_i32 = arith.constant 0 : i32
    %c0_i32_0 = arith.constant 0 : i32
    return %arg0, %c0_i32 : i32, i32
  }
  func.func @transform_3(%arg0: i32) -> (i32, i32) {
    %c0_i32 = arith.constant 0 : i32
    %c0_i32_0 = arith.constant 0 : i32
    %c0_i32_1 = arith.constant 0 : i32
    return %c0_i32, %c0_i32_0 : i32, i32
  }
  func.func @transform_4(%arg0: i32) -> (i32, i32) {
    %c0_i32 = arith.constant 0 : i32
    %c0_i32_0 = arith.constant 0 : i32
    %c0_i32_1 = arith.constant 0 : i32
    return %c0_i32, %c0_i32_0 : i32, i32
  }
  func.func @transform_5(%arg0: i32) -> (i32, i32) {
    %c0_i32 = arith.constant 0 : i32
    %c0_i32_0 = arith.constant 0 : i32
    %c0_i32_1 = arith.constant 0 : i32
    return %c0_i32, %c0_i32_0 : i32, i32
  }
  func.func @transform_6(%arg0: i32) -> (i32, i32) {
    %c0_i32 = arith.constant 0 : i32
    %c0_i32_0 = arith.constant 0 : i32
    %c0_i32_1 = arith.constant 0 : i32
    return %c0_i32, %c0_i32_0 : i32, i32
  }
  func.func @transform_7(%arg0: i32) -> (i32, i32) {
    %c0_i32 = arith.constant 0 : i32
    %c0_i32_0 = arith.constant 0 : i32
    %c0_i32_1 = arith.constant 0 : i32
    return %c0_i32, %c0_i32_0 : i32, i32
  }
  func.func @transform_8(%arg0: i32) -> (i32, i32) {
    %c0_i32 = arith.constant 0 : i32
    %c0_i32_0 = arith.constant 0 : i32
    %c0_i32_1 = arith.constant 0 : i32
    return %c0_i32, %c0_i32_0 : i32, i32
  }
  func.func @transform_9(%arg0: i32) -> (i32, i32) {
    %c0_i32 = arith.constant 0 : i32
    %c0_i32_0 = arith.constant 0 : i32
    %c0_i32_1 = arith.constant 0 : i32
    return %c0_i32, %c0_i32_0 : i32, i32
  }
  func.func @transform_10(%arg0: i32) -> (i32, i32) {
    %c0_i32 = arith.constant 0 : i32
    %c0_i32_0 = arith.constant 0 : i32
    %c0_i32_1 = arith.constant 0 : i32
    return %c0_i32, %c0_i32_0 : i32, i32
  }
  func.func @transform_11(%arg0: i32) -> (i32, i32) {
    %c0_i32 = arith.constant 0 : i32
    %c0_i32_0 = arith.constant 0 : i32
    %c0_i32_1 = arith.constant 0 : i32
    return %c0_i32, %c0_i32_0 : i32, i32
  }
  func.func @transform_12(%arg0: i32) -> (i32, i32) {
    %c0_i32 = arith.constant 0 : i32
    %c0_i32_0 = arith.constant 0 : i32
    %c0_i32_1 = arith.constant 0 : i32
    return %c0_i32, %c0_i32_0 : i32, i32
  }
  func.func @transform_13(%arg0: i32) -> (i32, i32) {
    %c0_i32 = arith.constant 0 : i32
    %c0_i32_0 = arith.constant 0 : i32
    %c0_i32_1 = arith.constant 0 : i32
    return %c0_i32, %c0_i32_0 : i32, i32
  }
  func.func @transform_14(%arg0: i32) -> (i32, i32) {
    %c0_i32 = arith.constant 0 : i32
    %c0_i32_0 = arith.constant 0 : i32
    %c0_i32_1 = arith.constant 0 : i32
    return %c0_i32, %c0_i32_0 : i32, i32
  }
  func.func @transform_15(%arg0: i32) -> (i32, i32) {
    %c0_i32 = arith.constant 0 : i32
    %c0_i32_0 = arith.constant 0 : i32
    %c0_i32_1 = arith.constant 0 : i32
    return %c0_i32, %c0_i32_0 : i32, i32
  }
  func.func @transform_16(%arg0: i32) -> (i32, i32) {
    %c0_i32 = arith.constant 0 : i32
    %c0_i32_0 = arith.constant 0 : i32
    %c0_i32_1 = arith.constant 0 : i32
    return %c0_i32, %c0_i32_0 : i32, i32
  }
  func.func @transform_17(%arg0: i32) -> (i32, i32) {
    %c0_i32 = arith.constant 0 : i32
    %c0_i32_0 = arith.constant 0 : i32
    return %arg0, %c0_i32 : i32, i32
  }
}

</mosaic_0001>

<llo_original>
// kernel: tpu_custom_call.1
$region0: #{tpu_custom_call.1}
  #allocation0 [shape = 'u32[]', space=smem, size = 0x4, offset = 0x4, fixed_abs, tag = 'smem constant byte address 0x4 - core index']
  #allocation1 [shape = 'u32[144,128]{1,0:T(1,128)}', space=vmem, size = 0x12000, scoped, tag = 'internal scratch']
  %s0 = inlined_call_operand.vmem [shape: s32[16,1], index: 0, kind: input, shape index: {}]
  %s1 = inlined_call_operand.vmem [shape: f32[1,1,16], index: 1, kind: input, shape index: {}]
  %s2 = inlined_call_operand.vmem [shape: f32[16,1], index: 2, kind: input, shape index: {}]
  %s3 = inlined_call_operand.hbm [shape: f32[16,128], index: 3, kind: input, shape index: {}]
  %s4 = inlined_call_operand.hbm [shape: f32[16,16], index: 4, kind: input, shape index: {}]
  %s5 = inlined_call_operand.vmem [shape: f32[32,128], index: 5, kind: input, shape index: {}]
  %s6 = inlined_call_operand.hbm [shape: bf16[128,384], index: 6, kind: input, shape index: {}]
  %s7 = inlined_call_operand.vmem [shape: f32[1,384], index: 7, kind: input, shape index: {}]
  %s8 = inlined_call_operand.vmem [shape: f32[1,128], index: 8, kind: input, shape index: {}]
  %s9 = inlined_call_operand.vmem [shape: f32[1,128], index: 9, kind: input, shape index: {}]
  %s10 = inlined_call_operand.vmem [shape: f32[1,128], index: 10, kind: input, shape index: {}]
  %s11 = inlined_call_operand.hbm [shape: bf16[128,256], index: 11, kind: input, shape index: {}]
  %s12 = inlined_call_operand.vmem [shape: f32[1,256], index: 12, kind: input, shape index: {}]
  %s13 = inlined_call_operand.hbm [shape: bf16[256,128], index: 13, kind: input, shape index: {}]
  %s14 = inlined_call_operand.vmem [shape: f32[1,128], index: 14, kind: input, shape index: {}]
  %s15 = inlined_call_operand.vmem [shape: f32[1,128], index: 15, kind: input, shape index: {}]
  %s16 = inlined_call_operand.vmem [shape: f32[1,128], index: 16, kind: input, shape index: {}]
  %s17 = inlined_call_operand.hbm [shape: f32[2,128], index: 17, kind: output, shape index: {}]
  %s18 = sld [smem:[#allocation0]]
  $region98: #{tpu_custom_call.1} parent=0
    _
  %s20 = ssub.s32 1, %s18
  %s21 = scalar_select 0, %s20, %s18
  $region1: #{tpu_custom_call.1} parent=0
    #allocation2 [shape = 'u8[8192]{0}', space=vmem, size = 0x2000, scoped, tag = 'input window, operand 3, single buffered']
    #allocation3 [shape = 's32[1]{0}', space=sflag, size = 0x4, scoped, tag = 'scoped memory for tpu_custom_call.1']
    #allocation4 [shape = 's32[1]{0}', space=sflag, size = 0x4, scoped, tag = 'scoped memory for tpu_custom_call.1']
    #allocation5 [shape = 'u8[8192]{0}', space=vmem, size = 0x2000, scoped, tag = 'input window, operand 4, single buffered']
    #allocation6 [shape = 's32[1]{0}', space=sflag, size = 0x4, scoped, tag = 'scoped memory for tpu_custom_call.1']
    #allocation7 [shape = 'u8[98304]{0}', space=vmem, size = 0x18000, scoped, tag = 'input window, operand 6, single buffered']
    #allocation8 [shape = 'u8[65536]{0}', space=vmem, size = 0x10000, scoped, tag = 'input window, operand 11, single buffered']
    #allocation9 [shape = 's32[1]{0}', space=sflag, size = 0x4, scoped, tag = 'scoped memory for tpu_custom_call.1']
    #allocation10 [shape = 'u8[65536]{0}', space=vmem, size = 0x10000, scoped, tag = 'input window, operand 13, single buffered']
    #allocation11 [shape = 'u8[1024]{0}', space=vmem, size = 0x400, scoped, tag = 'output window, operand 0, single buffered']
    %22 = vsyncpa [#allocation3], 0
    %23 = vsyncpa [#allocation6], 0
    %24 = vsyncpa [#allocation9], 0
    %25 = vsyncpa [#allocation4], 0
    // Predicated region
    $region2: #{tpu_custom_call.1} parent=1 // pred_check
      _
    $region3: #{tpu_custom_call.1} parent=1 // pred_check_branch
      %27 = sbr.rel (0) target = $region5
    $region4: #{tpu_custom_call.1} parent=1 // pred_region
      _
    $region5: #{tpu_custom_call.1} parent=1 // pred_fallthru
      _
    // Predicated region
    $region6: #{tpu_custom_call.1} parent=1 // pred_check
      _
    $region7: #{tpu_custom_call.1} parent=1 // pred_check_branch
      %29 = sbr.rel (0) target = $region9
    $region8: #{tpu_custom_call.1} parent=1 // pred_region
      _
    $region9: #{tpu_custom_call.1} parent=1 // pred_fallthru
      _
    // Predicated region
    $region10: #{tpu_custom_call.1} parent=1 // pred_check
      _
    $region11: #{tpu_custom_call.1} parent=1 // pred_check_branch
      %31 = sbr.rel (0) target = $region13
    $region12: #{tpu_custom_call.1} parent=1 // pred_region
      _
    $region13: #{tpu_custom_call.1} parent=1 // pred_fallthru
      _
    // Predicated region
    $region14: #{tpu_custom_call.1} parent=1 // pred_check
      _
    $region15: #{tpu_custom_call.1} parent=1 // pred_check_branch
      %33 = sbr.rel (0) target = $region17
    $region16: #{tpu_custom_call.1} parent=1 // pred_region
      %s35 = ssub.s32 256, 256
      %36 = vsyncadd [#allocation3], %s35
      %s37 = sshll.u32 [#allocation2], 4
      %s38 = int_to_ptr.vmem [resolvable:$true] %s37
      %43 = dma.hbm_to_vmem [thread:$0]  %s3, 256, %s38, [#allocation3], 128, 128, 8
    $region17: #{tpu_custom_call.1} parent=1 // pred_fallthru
      _
    // Predicated region
    $region18: #{tpu_custom_call.1} parent=1 // pred_check
      _
    $region19: #{tpu_custom_call.1} parent=1 // pred_check_branch
      %45 = sbr.rel (0) target = $region21
    $region20: #{tpu_custom_call.1} parent=1 // pred_region
      %s47 = ssub.s32 256, 256
      %48 = vsyncadd [#allocation6], %s47
      %s49 = sshll.u32 [#allocation5], 4
      %s50 = int_to_ptr.vmem [resolvable:$true] %s49
      %55 = dma.hbm_to_vmem [thread:$0]  %s4, 256, %s50, [#allocation6], 128, 128, 8
    $region21: #{tpu_custom_call.1} parent=1 // pred_fallthru
      _
    // Predicated region
    $region22: #{tpu_custom_call.1} parent=1 // pred_check
      _
    $region23: #{tpu_custom_call.1} parent=1 // pred_check_branch
      %57 = sbr.rel (0) target = $region25
    $region24: #{tpu_custom_call.1} parent=1 // pred_region
      _
    $region25: #{tpu_custom_call.1} parent=1 // pred_fallthru
      _
    // Predicated region
    $region26: #{tpu_custom_call.1} parent=1 // pred_check
      _
    $region27: #{tpu_custom_call.1} parent=1 // pred_check_branch
      %59 = sbr.rel (0) target = $region29
    $region28: #{tpu_custom_call.1} parent=1 // pred_region
      %s61 = ssub.s32 3072, 3072
      %62 = vsyncadd [#allocation6], %s61
      %s63 = sshll.u32 [#allocation7], 4
      %s64 = int_to_ptr.vmem [resolvable:$true] %s63
      %69 = dma.hbm_to_vmem [thread:$0]  %s6, 3072, %s64, [#allocation6], 192, 192, 12
    $region29: #{tpu_custom_call.1} parent=1 // pred_fallthru
      _
    // Predicated region
    $region30: #{tpu_custom_call.1} parent=1 // pred_check
      _
    $region31: #{tpu_custom_call.1} parent=1 // pred_check_branch
      %71 = sbr.rel (0) target = $region33
    $region32: #{tpu_custom_call.1} parent=1 // pred_region
      _
    $region33: #{tpu_custom_call.1} parent=1 // pred_fallthru
      _
    // Predicated region
    $region34: #{tpu_custom_call.1} parent=1 // pred_check
      _
    $region35: #{tpu_custom_call.1} parent=1 // pred_check_branch
      %73 = sbr.rel (0) target = $region37
    $region36: #{tpu_custom_call.1} parent=1 // pred_region
      _
    $region37: #{tpu_custom_call.1} parent=1 // pred_fallthru
      _
    // Predicated region
    $region38: #{tpu_custom_call.1} parent=1 // pred_check
      _
    $region39: #{tpu_custom_call.1} parent=1 // pred_check_branch
      %75 = sbr.rel (0) target = $region41
    $region40: #{tpu_custom_call.1} parent=1 // pred_region
      _
    $region41: #{tpu_custom_call.1} parent=1 // pred_fallthru
      _
    // Predicated region
    $region42: #{tpu_custom_call.1} parent=1 // pred_check
      _
    $region43: #{tpu_custom_call.1} parent=1 // pred_check_branch
      %77 = sbr.rel (0) target = $region45
    $region44: #{tpu_custom_call.1} parent=1 // pred_region
      _
    $region45: #{tpu_custom_call.1} parent=1 // pred_fallthru
      _
    // Predicated region
    $region46: #{tpu_custom_call.1} parent=1 // pred_check
      _
    $region47: #{tpu_custom_call.1} parent=1 // pred_check_branch
      %79 = sbr.rel (0) target = $region49
    $region48: #{tpu_custom_call.1} parent=1 // pred_region
      %s81 = ssub.s32 2048, 2048
      %82 = vsyncadd [#allocation9], %s81
      %s83 = sshll.u32 [#allocation8], 4
      %s84 = int_to_ptr.vmem [resolvable:$true] %s83
      %89 = dma.hbm_to_vmem [thread:$0]  %s11, 2048, %s84, [#allocation9], 128, 128, 8
    $region49: #{tpu_custom_call.1} parent=1 // pred_fallthru
      _
    // Predicated region
    $region50: #{tpu_custom_call.1} parent=1 // pred_check
      _
    $region51: #{tpu_custom_call.1} parent=1 // pred_check_branch
      %91 = sbr.rel (0) target = $region53
    $region52: #{tpu_custom_call.1} parent=1 // pred_region
      _
    $region53: #{tpu_custom_call.1} parent=1 // pred_fallthru
      _
    // Predicated region
    $region54: #{tpu_custom_call.1} parent=1 // pred_check
      _
    $region55: #{tpu_custom_call.1} parent=1 // pred_check_branch
      %93 = sbr.rel (0) target = $region57
    $region56: #{tpu_custom_call.1} parent=1 // pred_region
      %s95 = ssub.s32 2048, 2048
      %96 = vsyncadd [#allocation9], %s95
      %s97 = sshll.u32 [#allocation10], 4
      %s98 = int_to_ptr.vmem [resolvable:$true] %s97
      %103 = dma.hbm_to_vmem [thread:$0]  %s13, 2048, %s98, [#allocation9], 64, 64, 4
    $region57: #{tpu_custom_call.1} parent=1 // pred_fallthru
      _
    // Predicated region
    $region58: #{tpu_custom_call.1} parent=1 // pred_check
      _
    $region59: #{tpu_custom_call.1} parent=1 // pred_check_branch
      %105 = sbr.rel (0) target = $region61
    $region60: #{tpu_custom_call.1} parent=1 // pred_region
      _
    $region61: #{tpu_custom_call.1} parent=1 // pred_fallthru
      _
    // Predicated region
    $region62: #{tpu_custom_call.1} parent=1 // pred_check
      _
    $region63: #{tpu_custom_call.1} parent=1 // pred_check_branch
      %107 = sbr.rel (0) target = $region65
    $region64: #{tpu_custom_call.1} parent=1 // pred_region
      _
    $region65: #{tpu_custom_call.1} parent=1 // pred_fallthru
      _
    // Predicated region
    $region66: #{tpu_custom_call.1} parent=1 // pred_check
      _
    $region67: #{tpu_custom_call.1} parent=1 // pred_check_branch
      %109 = sbr.rel (0) target = $region69
    $region68: #{tpu_custom_call.1} parent=1 // pred_region
      _
    $region69: #{tpu_custom_call.1} parent=1 // pred_fallthru
      _
    // Predicated region
    $region70: #{tpu_custom_call.1} parent=1 // pred_check
      _
    $region71: #{tpu_custom_call.1} parent=1 // pred_check_branch
      %111 = sbr.rel (0) target = $region73
    $region72: #{tpu_custom_call.1} parent=1 // pred_region
      %112 = dma.done [#allocation3], 256
    $region73: #{tpu_custom_call.1} parent=1 // pred_fallthru
      _
    // Predicated region
    $region74: #{tpu_custom_call.1} parent=1 // pred_check
      _
    $region75: #{tpu_custom_call.1} parent=1 // pred_check_branch
      %114 = sbr.rel (0) target = $region77
    $region76: #{tpu_custom_call.1} parent=1 // pred_region
      %115 = dma.done [#allocation6], 256
    $region77: #{tpu_custom_call.1} parent=1 // pred_fallthru
      _
    // Predicated region
    $region78: #{tpu_custom_call.1} parent=1 // pred_check
      _
    $region79: #{tpu_custom_call.1} parent=1 // pred_check_branch
      %117 = sbr.rel (0) target = $region81
    $region80: #{tpu_custom_call.1} parent=1 // pred_region
      %118 = dma.done [#allocation6], 3072
    $region81: #{tpu_custom_call.1} parent=1 // pred_fallthru
      _
    // Predicated region
    $region82: #{tpu_custom_call.1} parent=1 // pred_check
      _
    $region83: #{tpu_custom_call.1} parent=1 // pred_check_branch
      %120 = sbr.rel (0) target = $region85
    $region84: #{tpu_custom_call.1} parent=1 // pred_region
      %121 = dma.done [#allocation9], 2048
    $region85: #{tpu_custom_call.1} parent=1 // pred_fallthru
      _
    // Predicated region
    $region86: #{tpu_custom_call.1} parent=1 // pred_check
      _
    $region87: #{tpu_custom_call.1} parent=1 // pred_check_branch
      %123 = sbr.rel (0) target = $region89
    $region88: #{tpu_custom_call.1} parent=1 // pred_region
      %124 = dma.done [#allocation9], 2048
    $region89: #{tpu_custom_call.1} parent=1 // pred_fallthru
      _
    %v126 = vld [vmem:[%s0] sm:$0xff]
    %v127 = vld [vmem:[%s0 + $0x8] sm:$0xff]
    %v128 = vlaneseq
    %v129 = vand.u32 %v128, 127
    %130 = vset.pattern.permute.xlu0 0
    %131 = vperm.xlu0 %130, %v126
    %v132 = vpop.permute.xlu0 %131
    %133 = vset.pattern.permute.xlu0 0
    %134 = vperm.xlu0 %133, %v127
    %v135 = vpop.permute.xlu0 %134
    %vm136 = vcmp.eq.s32.totalorder %v132, %v129
    %vm137 = vcmp.eq.s32.totalorder %v135, %v129
    %v138 = vsel %vm136, 1, 0
    %v139 = vsel %vm137, 1, 0
    %v140 = vcvt.s32.f32 %v138
    %v141 = vcvt.s32.f32 %v139
    %v142 = vld [vmem:[%s5] sm:$0xff]
    %v143 = vld [vmem:[%s5 + $0x8] sm:$0xff]
    %v144 = vld [vmem:[%s5 + $0x10] sm:$0xff]
    %v145 = vld [vmem:[%s5 + $0x18] sm:$0xff]
    %v146 = vld [vmem:[#allocation2] sm:$0xff]
    %v147 = vld [vmem:[#allocation2 + $0x8] sm:$0xff]
    %vm148 = vcmask 261120
    %v150 = vsel %vm148, %v140, 0
    %v153 = vsel %vm148, %v141, 0
    %155 = vmatprep.subr.mxu0 0.0
    %156 = vmatpush1.msra.mxu0 0.0
    %157 = vmatprep.subr.mxu0 0.0
    %158 = vmatpush1.msra.mxu0 0.0
    %159 = vmatprep.subr.mxu0 0.0
    %160 = vmatpush1.msra.mxu0 0.0
    %161 = vmatprep.subr.mxu0 0.0
    %162 = vmatpush1.msra.mxu0 0.0
    %163 = vmatprep.subr.mxu0 0.0
    %164 = vmatpush1.msra.mxu0 0.0
    %165 = vmatprep.subr.mxu0 0.0
    %166 = vmatpush1.msra.mxu0 0.0
    %167 = vmatprep.subr.mxu0 0.0
    %168 = vmatpush1.msra.mxu0 0.0
    %169 = vmatprep.subr.mxu0 0.0
    %170 = vmatpush1.msra.mxu0 0.0
    %171 = vmatprep.subr.mxu0 0.0
    %172 = vmatpush1.msra.mxu0 0.0
    %173 = vmatprep.subr.mxu0 0.0
    %174 = vmatpush1.msra.mxu0 0.0
    %175 = vmatprep.subr.mxu0 0.0
    %176 = vmatpush1.msra.mxu0 0.0
    %177 = vmatprep.subr.mxu0 0.0
    %178 = vmatpush1.msra.mxu0 0.0
    %179 = vmatprep.subr.mxu0 0.0
    %180 = vmatpush1.msra.mxu0 %v145
    %181 = vmatprep.subr.mxu0 0.0
    %182 = vmatpush1.msra.mxu0 %v144
    %183 = vmatprep.subr.mxu0 0.0
    %184 = vmatpush1.msra.mxu0 %v143
    %185 = vmatprep.subr.mxu0 0.0
    %186 = vmatpush1.msra.mxu0 %v142
    %187 = vmatprep.subr.mxu0 0.0
    %188 = vmatpush2.msra.mxu0 0.0
    %189 = vmatprep.subr.mxu0 0.0
    %190 = vmatpush2.msra.mxu0 0.0
    %191 = vmatprep.subr.mxu0 0.0
    %192 = vmatpush2.msra.mxu0 0.0
    %193 = vmatprep.subr.mxu0 0.0
    %194 = vmatpush2.msra.mxu0 0.0
    %195 = vmatprep.subr.mxu0 0.0
    %196 = vmatpush2.msra.mxu0 0.0
    %197 = vmatprep.subr.mxu0 0.0
    %198 = vmatpush2.msra.mxu0 0.0
    %199 = vmatprep.subr.mxu0 0.0
    %200 = vmatpush2.msra.mxu0 0.0
    %201 = vmatprep.subr.mxu0 0.0
    %202 = vmatpush2.msra.mxu0 0.0
    %203 = vmatprep.subr.mxu0 0.0
    %204 = vmatpush2.msra.mxu0 0.0
    %205 = vmatprep.subr.mxu0 0.0
    %206 = vmatpush2.msra.mxu0 0.0
    %207 = vmatprep.subr.mxu0 0.0
    %208 = vmatpush2.msra.mxu0 0.0
    %209 = vmatprep.subr.mxu0 0.0
    %210 = vmatpush2.msra.mxu0 0.0
    %211 = vmatprep.subr.mxu0 0.0
    %212 = vmatpush2.msra.mxu0 0.0
    %213 = vmatprep.subr.mxu0 0.0
    %214 = vmatpush2.msra.mxu0 0.0
    %215 = vmatprep.subr.mxu0 0.0
    %216 = vmatpush2.msra.mxu0 0.0
    %217 = vmatprep.subr.mxu0 0.0
    %218 = vmatpush2.msra.mxu0 0.0
    %219 = vmatprep.mubr.f32.mxu0 0.0
    %220 = vmatmul.mubr.f32.gmra.mxu0 %v150
    %v221 = vpop.f32.mrf.mxu0
    %v222 = vadd.f32 %v146, %v221
    %v223 = vpop.f32.mrf.mxu0
    %224 = vmatprep.mubr.f32.mxu0 0.0
    %225 = vmatmul.mubr.f32.gmra.mxu0 %v153
    %v226 = vpop.f32.mrf.mxu0
    %v227 = vadd.f32 %v147, %v226
    %v228 = vpop.f32.mrf.mxu0
    %229 = vdwg.mxu0
    %v230 = vpack.c.bf16 %v227, %v222
    %v231 = vld [vmem:[#allocation7] sm:$0xff]
    %v232 = vld [vmem:[#allocation7 + $0x8] sm:$0xf]
    %v233 = vld [vmem:[#allocation7 + $0xc] sm:$0xff]
    %v234 = vld [vmem:[#allocation7 + $0x14] sm:$0xf]
    %v235 = vld [vmem:[#allocation7 + $0x18] sm:$0xff]
    %v236 = vld [vmem:[#allocation7 + $0x20] sm:$0xf]
    %v237 = vld [vmem:[#allocation7 + $0x24] sm:$0xff]
    %v238 = vld [vmem:[#allocation7 + $0x2c] sm:$0xf]
    %v239 = vld [vmem:[#allocation7 + $0x30] sm:$0xff]
    %v240 = vld [vmem:[#allocation7 + $0x38] sm:$0xf]
    %v241 = vld [vmem:[#allocation7 + $0x3c] sm:$0xff]
    %v242 = vld [vmem:[#allocation7 + $0x44] sm:$0xf]
    %v243 = vld [vmem:[#allocation7 + $0x48] sm:$0xff]
    %v244 = vld [vmem:[#allocation7 + $0x50] sm:$0xf]
    %v245 = vld [vmem:[#allocation7 + $0x54] sm:$0xff]
    %v246 = vld [vmem:[#allocation7 + $0x5c] sm:$0xf]
    %v247 = vld [vmem:[#allocation7 + $0x60] sm:$0xff]
    %v248 = vld [vmem:[#allocation7 + $0x68] sm:$0xf]
    %v249 = vld [vmem:[#allocation7 + $0x6c] sm:$0xff]
    %v250 = vld [vmem:[#allocation7 + $0x74] sm:$0xf]
    %v251 = vld [vmem:[#allocation7 + $0x78] sm:$0xff]
    %v252 = vld [vmem:[#allocation7 + $0x80] sm:$0xf]
    %v253 = vld [vmem:[#allocation7 + $0x84] sm:$0xff]
    %v254 = vld [vmem:[#allocation7 + $0x8c] sm:$0xf]
    %v255 = vld [vmem:[#allocation7 + $0x90] sm:$0xff]
    %v256 = vld [vmem:[#allocation7 + $0x98] sm:$0xf]
    %v257 = vld [vmem:[#allocation7 + $0x9c] sm:$0xff]
    %v258 = vld [vmem:[#allocation7 + $0xa4] sm:$0xf]
    %v259 = vld [vmem:[#allocation7 + $0xa8] sm:$0xff]
    %v260 = vld [vmem:[#allocation7 + $0xb0] sm:$0xf]
    %v261 = vld [vmem:[#allocation7 + $0xb4] sm:$0xff]
    %v262 = vld [vmem:[#allocation7 + $0xbc] sm:$0xf]
    %v263 = vld [vmem:[%s7] sm:$0x7]
    %v265 = vlaneseq
    %v266 = vshrl.u32 %v265, 7
    %v267 = vsub.s32 0, %v266
    %v268 = vrot.slane %v263, %v267
    %v269 = vlaneseq
    %v270 = vshrl.u32 %v269, 7
    %v271 = vsub.s32 1, %v270
    %v272 = vrot.slane %v263, %v271
    %v273 = vlaneseq
    %v274 = vshrl.u32 %v273, 7
    %v275 = vsub.s32 2, %v274
    %v276 = vrot.slane %v263, %v275
    %v312 = vunpack.c.l.b16 %v231
    %v313 = vunpack.c.h.b16 %v231
    %v314 = vunpack.c.l.b16 %v232
    %v315 = vunpack.c.l.b16 %v233
    %v316 = vunpack.c.h.b16 %v233
    %v317 = vunpack.c.l.b16 %v234
    %v318 = vunpack.c.l.b16 %v235
    %v319 = vunpack.c.h.b16 %v235
    %v320 = vunpack.c.l.b16 %v236
    %v321 = vunpack.c.l.b16 %v237
    %v322 = vunpack.c.h.b16 %v237
    %v323 = vunpack.c.l.b16 %v238
    %v324 = vunpack.c.l.b16 %v239
    %v325 = vunpack.c.h.b16 %v239
    %v326 = vunpack.c.l.b16 %v240
    %v327 = vunpack.c.l.b16 %v241
    %v328 = vunpack.c.h.b16 %v241
    %v329 = vunpack.c.l.b16 %v242
    %v330 = vunpack.c.l.b16 %v243
    %v331 = vunpack.c.h.b16 %v243
    %v332 = vunpack.c.l.b16 %v244
    %v333 = vunpack.c.l.b16 %v245
    %v334 = vunpack.c.h.b16 %v245
    %v335 = vunpack.c.l.b16 %v246
    %v336 = vunpack.c.l.b16 %v247
    %v337 = vunpack.c.h.b16 %v247
    %v338 = vunpack.c.l.b16 %v248
    %v339 = vunpack.c.l.b16 %v249
    %v340 = vunpack.c.h.b16 %v249
    %v341 = vunpack.c.l.b16 %v250
    %v342 = vunpack.c.l.b16 %v251
    %v343 = vunpack.c.h.b16 %v251
    %v344 = vunpack.c.l.b16 %v252
    %v345 = vunpack.c.l.b16 %v253
    %v346 = vunpack.c.h.b16 %v253
    %v347 = vunpack.c.l.b16 %v254
    %v348 = vunpack.c.l.b16 %v255
    %v349 = vunpack.c.h.b16 %v255
    %v350 = vunpack.c.l.b16 %v256
    %v351 = vunpack.c.l.b16 %v257
    %v352 = vunpack.c.h.b16 %v257
    %v353 = vunpack.c.l.b16 %v258
    %v354 = vunpack.c.l.b16 %v259
    %v355 = vunpack.c.h.b16 %v259
    %v356 = vunpack.c.l.b16 %v260
    %v357 = vunpack.c.l.b16 %v261
    %v358 = vunpack.c.h.b16 %v261
    %v359 = vunpack.c.l.b16 %v262
    %v360 = vpack.c.b16 %v315, %v312
    %v361 = vpack.c.b16 %v316, %v313
    %v362 = vpack.c.b16 %v317, %v314
    %v363 = vpack.c.b16 %v321, %v318
    %v364 = vpack.c.b16 %v322, %v319
    %v365 = vpack.c.b16 %v323, %v320
    %v366 = vpack.c.b16 %v327, %v324
    %v367 = vpack.c.b16 %v328, %v325
    %v368 = vpack.c.b16 %v329, %v326
    %v369 = vpack.c.b16 %v333, %v330
    %v370 = vpack.c.b16 %v334, %v331
    %v371 = vpack.c.b16 %v335, %v332
    %v372 = vpack.c.b16 %v339, %v336
    %v373 = vpack.c.b16 %v340, %v337
    %v374 = vpack.c.b16 %v341, %v338
    %v375 = vpack.c.b16 %v345, %v342
    %v376 = vpack.c.b16 %v346, %v343
    %v377 = vpack.c.b16 %v347, %v344
    %v378 = vpack.c.b16 %v351, %v348
    %v379 = vpack.c.b16 %v352, %v349
    %v380 = vpack.c.b16 %v353, %v350
    %v381 = vpack.c.b16 %v357, %v354
    %v382 = vpack.c.b16 %v358, %v355
    %v383 = vpack.c.b16 %v359, %v356
    %408 = vmatprep.subr.bf16.mxu0 %v382
    %409 = vmatpush1.bf16.msra.mxu0 %v381
    %410 = vmatprep.subr.bf16.mxu0 %v379
    %411 = vmatpush1.bf16.msra.mxu0 %v378
    %412 = vmatprep.subr.bf16.mxu0 %v376
    %413 = vmatpush1.bf16.msra.mxu0 %v375
    %414 = vmatprep.subr.bf16.mxu0 %v373
    %415 = vmatpush1.bf16.msra.mxu0 %v372
    %416 = vmatprep.subr.bf16.mxu0 %v370
    %417 = vmatpush1.bf16.msra.mxu0 %v369
    %418 = vmatprep.subr.bf16.mxu0 %v367
    %419 = vmatpush1.bf16.msra.mxu0 %v366
    %420 = vmatprep.subr.bf16.mxu0 %v364
    %421 = vmatpush1.bf16.msra.mxu0 %v363
    %422 = vmatprep.subr.bf16.mxu0 %v361
    %423 = vmatpush1.bf16.msra.mxu0 %v360
    %424 = vmatprep.subr.bf16.mxu0 0
    %425 = vmatpush2.bf16.msra.mxu0 0
    %426 = vmatprep.subr.bf16.mxu0 0
    %427 = vmatpush2.bf16.msra.mxu0 0
    %428 = vmatprep.subr.bf16.mxu0 0
    %429 = vmatpush2.bf16.msra.mxu0 0
    %430 = vmatprep.subr.bf16.mxu0 0
    %431 = vmatpush2.bf16.msra.mxu0 0
    %432 = vmatprep.subr.bf16.mxu0 0
    %433 = vmatpush2.bf16.msra.mxu0 0
    %434 = vmatprep.subr.bf16.mxu0 0
    %435 = vmatpush2.bf16.msra.mxu0 0
    %436 = vmatprep.subr.bf16.mxu0 0
    %437 = vmatpush2.bf16.msra.mxu0 0
    %438 = vmatprep.subr.bf16.mxu0 0
    %439 = vmatpush2.bf16.msra.mxu0 0
    %440 = vmatprep.mubr.bf16.mxu0 0
    %441 = vmatmul.mubr.bf16.gmra.mxu0 %v230
    %v442 = vpop.f32.mrf.mxu0
    %v443 = vadd.f32 %v268, %v442
    %v444 = vpop.f32.mrf.mxu0
    %v445 = vadd.f32 %v272, %v444
    %v446 = vpop.f32.mrf.mxu0
    %v447 = vadd.f32 %v268, %v446
    %v448 = vpop.f32.mrf.mxu0
    %v449 = vadd.f32 %v272, %v448
    %450 = vdwg.mxu0
    %451 = vmatprep.subr.bf16.mxu0 0
    %452 = vmatpush1.bf16.msra.mxu0 %v383
    %453 = vmatprep.subr.bf16.mxu0 0
    %454 = vmatpush1.bf16.msra.mxu0 %v380
    %455 = vmatprep.subr.bf16.mxu0 0
    %456 = vmatpush1.bf16.msra.mxu0 %v377
    %457 = vmatprep.subr.bf16.mxu0 0
    %458 = vmatpush1.bf16.msra.mxu0 %v374
    %459 = vmatprep.subr.bf16.mxu0 0
    %460 = vmatpush1.bf16.msra.mxu0 %v371
    %461 = vmatprep.subr.bf16.mxu0 0
    %462 = vmatpush1.bf16.msra.mxu0 %v368
    %463 = vmatprep.subr.bf16.mxu0 0
    %464 = vmatpush1.bf16.msra.mxu0 %v365
    %465 = vmatprep.subr.bf16.mxu0 0
    %466 = vmatpush1.bf16.msra.mxu0 %v362
    %467 = vmatprep.subr.bf16.mxu0 0
    %468 = vmatpush2.bf16.msra.mxu0 0
    %469 = vmatprep.subr.bf16.mxu0 0
    %470 = vmatpush2.bf16.msra.mxu0 0
    %471 = vmatprep.subr.bf16.mxu0 0
    %472 = vmatpush2.bf16.msra.mxu0 0
    %473 = vmatprep.subr.bf16.mxu0 0
    %474 = vmatpush2.bf16.msra.mxu0 0
    %475 = vmatprep.subr.bf16.mxu0 0
    %476 = vmatpush2.bf16.msra.mxu0 0
    %477 = vmatprep.subr.bf16.mxu0 0
    %478 = vmatpush2.bf16.msra.mxu0 0
    %479 = vmatprep.subr.bf16.mxu0 0
    %480 = vmatpush2.bf16.msra.mxu0 0
    %481 = vmatprep.subr.bf16.mxu0 0
    %482 = vmatpush2.bf16.msra.mxu0 0
    %483 = vmatprep.mubr.bf16.mxu0 0
    %484 = vmatmul.mubr.bf16.gmra.mxu0 %v230
    %v485 = vpop.f32.mrf.mxu0
    %v486 = vadd.f32 %v276, %v485
    %v487 = vpop.f32.mrf.mxu0
    %v488 = vpop.f32.mrf.mxu0
    %v489 = vadd.f32 %v276, %v488
    %v490 = vpop.f32.mrf.mxu0
    %491 = vdwg.mxu0
    %v492 = vpack.c.bf16 %v447, %v443
    %v493 = vpack.c.bf16 %v449, %v445
    %v494 = vpack.c.bf16 %v489, %v486
    %v495 = vld [vmem:[#allocation5] sm:$0xff]
    %v496 = vld [vmem:[#allocation5 + $0x8] sm:$0xff]
    %v497 = vld [vmem:[%s1] sm:$0x1]
    %v499 = vlaneseq
    %v500 = vshrl.u32 %v499, 7
    %v501 = vsub.s32 0, %v500
    %v502 = vrot.slane %v497, %v501
    %v504 = vadd.f32 %v495, %v502
    %v505 = vadd.f32 %v496, %v502
    %506 = vmatprep.subr.bf16.mxu0 0
    %507 = vmatpush1.bf16.xpose.msra.mxu0 0
    %508 = vmatprep.subr.bf16.mxu0 0
    %509 = vmatpush1.bf16.xpose.msra.mxu0 0
    %510 = vmatprep.subr.bf16.mxu0 0
    %511 = vmatpush1.bf16.xpose.msra.mxu0 0
    %512 = vmatprep.subr.bf16.mxu0 0
    %513 = vmatpush1.bf16.xpose.msra.mxu0 0
    %514 = vmatprep.subr.bf16.mxu0 0
    %515 = vmatpush1.bf16.xpose.msra.mxu0 0
    %516 = vmatprep.subr.bf16.mxu0 0
    %517 = vmatpush1.bf16.xpose.msra.mxu0 0
    %518 = vmatprep.subr.bf16.mxu0 0
    %519 = vmatpush1.bf16.xpose.msra.mxu0 0
    %520 = vmatprep.subr.bf16.mxu0 0
    %521 = vmatpush1.bf16.xpose.msra.mxu0 %v493
    %522 = vmatprep.subr.bf16.mxu0 0
    %523 = vmatpush2.bf16.xpose.msra.mxu0 0
    %524 = vmatprep.subr.bf16.mxu0 0
    %525 = vmatpush2.bf16.xpose.msra.mxu0 0
    %526 = vmatprep.subr.bf16.mxu0 0
    %527 = vmatpush2.bf16.xpose.msra.mxu0 0
    %528 = vmatprep.subr.bf16.mxu0 0
    %529 = vmatpush2.bf16.xpose.msra.mxu0 0
    %530 = vmatprep.subr.bf16.mxu0 0
    %531 = vmatpush2.bf16.xpose.msra.mxu0 0
    %532 = vmatprep.subr.bf16.mxu0 0
    %533 = vmatpush2.bf16.xpose.msra.mxu0 0
    %534 = vmatprep.subr.bf16.mxu0 0
    %535 = vmatpush2.bf16.xpose.msra.mxu0 0
    %536 = vmatprep.subr.bf16.mxu0 0
    %537 = vmatpush2.bf16.xpose.msra.mxu0 0
    %538 = vmatprep.mubr.bf16.mxu0 0
    %539 = vmatmul.mubr.bf16.gmra.mxu0 %v492
    %v540 = vpop.f32.mrf.mxu0
    %v541 = vadd.f32 %v504, %v540
    %v542 = vpop.f32.mrf.mxu0
    %v543 = vpop.f32.mrf.mxu0
    %v544 = vadd.f32 %v505, %v543
    %v545 = vpop.f32.mrf.mxu0
    %546 = vdwg.mxu0
    %vm547 = vcmask 130048
    %v548 = vsel %vm547, %v541, -inf
    %549 = vmax.xlane.f32.xlu0 %v548
    %v550 = vpop.xlane.xlu0 %549
    %v551 = vsel %vm547, %v544, -inf
    %552 = vmax.xlane.f32.xlu0 %v551
    %v553 = vpop.xlane.xlu0 %552
    %v554 = vsub.f32 %v541, %v550
    %v555 = vsub.f32 %v544, %v553
    %v556 = vmul.f32 %v554, 1.442695
    %v557 = vpow.pop %v556
    %v558 = vmul.f32 %v555, 1.442695
    %v559 = vpow.pop %v558
    %v560 = vsel %vm547, %v557, 0.0
    %561 = vadd.xlane.f32.xlu0 %v560
    %v562 = vpop.xlane.xlu0 %561
    %v563 = vsel %vm547, %v559, 0.0
    %564 = vadd.xlane.f32.xlu0 %v563
    %v565 = vpop.xlane.xlu0 %564
    %v566 = vrcp.pop %v562
    %v567 = vrcp.pop %v565
    %v568 = vmul.f32 %v557, %v566
    %v569 = vmul.f32 %v559, %v567
    %v570 = vpack.c.bf16 %v569, %v568
    %v571 = vld [vmem:[%s8] sm:$0x1]
    %v573 = vlaneseq
    %v574 = vshrl.u32 %v573, 7
    %v575 = vsub.s32 0, %v574
    %v576 = vrot.slane %v571, %v575
    %v579 = vsel %vm547, %v570, 0
    %581 = vmatprep.subr.bf16.mxu0 0
    %582 = vmatpush1.bf16.msra.mxu0 0
    %583 = vmatprep.subr.bf16.mxu0 0
    %584 = vmatpush1.bf16.msra.mxu0 0
    %585 = vmatprep.subr.bf16.mxu0 0
    %586 = vmatpush1.bf16.msra.mxu0 0
    %587 = vmatprep.subr.bf16.mxu0 0
    %588 = vmatpush1.bf16.msra.mxu0 0
    %589 = vmatprep.subr.bf16.mxu0 0
    %590 = vmatpush1.bf16.msra.mxu0 0
    %591 = vmatprep.subr.bf16.mxu0 0
    %592 = vmatpush1.bf16.msra.mxu0 0
    %593 = vmatprep.subr.bf16.mxu0 0
    %594 = vmatpush1.bf16.msra.mxu0 0
    %595 = vmatprep.subr.bf16.mxu0 0
    %596 = vmatpush1.bf16.msra.mxu0 %v494
    %597 = vmatprep.subr.bf16.mxu0 0
    %598 = vmatpush2.bf16.msra.mxu0 0
    %599 = vmatprep.subr.bf16.mxu0 0
    %600 = vmatpush2.bf16.msra.mxu0 0
    %601 = vmatprep.subr.bf16.mxu0 0
    %602 = vmatpush2.bf16.msra.mxu0 0
    %603 = vmatprep.subr.bf16.mxu0 0
    %604 = vmatpush2.bf16.msra.mxu0 0
    %605 = vmatprep.subr.bf16.mxu0 0
    %606 = vmatpush2.bf16.msra.mxu0 0
    %607 = vmatprep.subr.bf16.mxu0 0
    %608 = vmatpush2.bf16.msra.mxu0 0
    %609 = vmatprep.subr.bf16.mxu0 0
    %610 = vmatpush2.bf16.msra.mxu0 0
    %611 = vmatprep.subr.bf16.mxu0 0
    %612 = vmatpush2.bf16.msra.mxu0 0
    %613 = vmatprep.mubr.bf16.mxu0 0
    %614 = vmatmul.mubr.bf16.gmra.mxu0 %v579
    %v615 = vpop.f32.mrf.mxu0
    %v616 = vadd.f32 %v576, %v615
    %v617 = vpop.f32.mrf.mxu0
    %v618 = vpop.f32.mrf.mxu0
    %v619 = vadd.f32 %v576, %v618
    %v620 = vpop.f32.mrf.mxu0
    %621 = vdwg.mxu0
    %v622 = vadd.f32 %v222, %v616
    %v623 = vadd.f32 %v227, %v619
    %v624 = vld [vmem:[%s9] sm:$0x1]
    %v625 = vld [vmem:[%s10] sm:$0x1]
    %626 = vadd.xlane.f32.xlu0 %v622
    %v627 = vpop.xlane.xlu0 %626
    %628 = vadd.xlane.f32.xlu0 %v623
    %v629 = vpop.xlane.xlu0 %628
    %v630 = vrcp.pop 128.0
    %v631 = vmul.f32 %v627, %v630
    %v632 = vmul.f32 %v629, %v630
    %v633 = vmul.f32 %v622, %v622
    %v634 = vmul.f32 %v623, %v623
    %635 = vadd.xlane.f32.xlu0 %v633
    %v636 = vpop.xlane.xlu0 %635
    %637 = vadd.xlane.f32.xlu0 %v634
    %v638 = vpop.xlane.xlu0 %637
    %v639 = vmul.f32 %v636, %v630
    %v640 = vmul.f32 %v638, %v630
    %v641 = vmul.f32 %v631, %v631
    %v642 = vmul.f32 %v632, %v632
    %v643 = vsub.f32 %v639, %v641
    %v644 = vsub.f32 %v640, %v642
    %v645 = vsub.f32 %v622, %v631
    %v646 = vsub.f32 %v623, %v632
    %v647 = vadd.f32 %v643, 1e-05
    %v648 = vadd.f32 %v644, 1e-05
    %v649 = vrsqrt.pop %v647
    %v650 = vrsqrt.pop %v648
    %v651 = vmul.f32 %v645, %v649
    %v652 = vmul.f32 %v646, %v650
    %v654 = vlaneseq
    %v655 = vshrl.u32 %v654, 7
    %v656 = vsub.s32 0, %v655
    %v657 = vrot.slane %v624, %v656
    %v659 = vmul.f32 %v651, %v657
    %v660 = vmul.f32 %v652, %v657
    %v662 = vlaneseq
    %v663 = vshrl.u32 %v662, 7
    %v664 = vsub.s32 0, %v663
    %v665 = vrot.slane %v625, %v664
    %v667 = vadd.f32 %v659, %v665
    %v668 = vadd.f32 %v660, %v665
    %v669 = vpack.c.bf16 %v668, %v667
    %v670 = vld [vmem:[#allocation8] sm:$0xff]
    %v671 = vld [vmem:[#allocation8 + $0x8] sm:$0xff]
    %v672 = vld [vmem:[#allocation8 + $0x10] sm:$0xff]
    %v673 = vld [vmem:[#allocation8 + $0x18] sm:$0xff]
    %v674 = vld [vmem:[#allocation8 + $0x20] sm:$0xff]
    %v675 = vld [vmem:[#allocation8 + $0x28] sm:$0xff]
    %v676 = vld [vmem:[#allocation8 + $0x30] sm:$0xff]
    %v677 = vld [vmem:[#allocation8 + $0x38] sm:$0xff]
    %v678 = vld [vmem:[#allocation8 + $0x40] sm:$0xff]
    %v679 = vld [vmem:[#allocation8 + $0x48] sm:$0xff]
    %v680 = vld [vmem:[#allocation8 + $0x50] sm:$0xff]
    %v681 = vld [vmem:[#allocation8 + $0x58] sm:$0xff]
    %v682 = vld [vmem:[#allocation8 + $0x60] sm:$0xff]
    %v683 = vld [vmem:[#allocation8 + $0x68] sm:$0xff]
    %v684 = vld [vmem:[#allocation8 + $0x70] sm:$0xff]
    %v685 = vld [vmem:[#allocation8 + $0x78] sm:$0xff]
    %v686 = vld [vmem:[%s12] sm:$0x3]
    %v688 = vlaneseq
    %v689 = vshrl.u32 %v688, 7
    %v690 = vsub.s32 0, %v689
    %v691 = vrot.slane %v686, %v690
    %v692 = vlaneseq
    %v693 = vshrl.u32 %v692, 7
    %v694 = vsub.s32 1, %v693
    %v695 = vrot.slane %v686, %v694
    %v714 = vunpack.c.l.b16 %v670
    %v715 = vunpack.c.h.b16 %v670
    %v716 = vunpack.c.l.b16 %v671
    %v717 = vunpack.c.h.b16 %v671
    %v718 = vunpack.c.l.b16 %v672
    %v719 = vunpack.c.h.b16 %v672
    %v720 = vunpack.c.l.b16 %v673
    %v721 = vunpack.c.h.b16 %v673
    %v722 = vunpack.c.l.b16 %v674
    %v723 = vunpack.c.h.b16 %v674
    %v724 = vunpack.c.l.b16 %v675
    %v725 = vunpack.c.h.b16 %v675
    %v726 = vunpack.c.l.b16 %v676
    %v727 = vunpack.c.h.b16 %v676
    %v728 = vunpack.c.l.b16 %v677
    %v729 = vunpack.c.h.b16 %v677
    %v730 = vunpack.c.l.b16 %v678
    %v731 = vunpack.c.h.b16 %v678
    %v732 = vunpack.c.l.b16 %v679
    %v733 = vunpack.c.h.b16 %v679
    %v734 = vunpack.c.l.b16 %v680
    %v735 = vunpack.c.h.b16 %v680
    %v736 = vunpack.c.l.b16 %v681
    %v737 = vunpack.c.h.b16 %v681
    %v738 = vunpack.c.l.b16 %v682
    %v739 = vunpack.c.h.b16 %v682
    %v740 = vunpack.c.l.b16 %v683
    %v741 = vunpack.c.h.b16 %v683
    %v742 = vunpack.c.l.b16 %v684
    %v743 = vunpack.c.h.b16 %v684
    %v744 = vunpack.c.l.b16 %v685
    %v745 = vunpack.c.h.b16 %v685
    %v746 = vpack.c.b16 %v716, %v714
    %v747 = vpack.c.b16 %v717, %v715
    %v748 = vpack.c.b16 %v720, %v718
    %v749 = vpack.c.b16 %v721, %v719
    %v750 = vpack.c.b16 %v724, %v722
    %v751 = vpack.c.b16 %v725, %v723
    %v752 = vpack.c.b16 %v728, %v726
    %v753 = vpack.c.b16 %v729, %v727
    %v754 = vpack.c.b16 %v732, %v730
    %v755 = vpack.c.b16 %v733, %v731
    %v756 = vpack.c.b16 %v736, %v734
    %v757 = vpack.c.b16 %v737, %v735
    %v758 = vpack.c.b16 %v740, %v738
    %v759 = vpack.c.b16 %v741, %v739
    %v760 = vpack.c.b16 %v744, %v742
    %v761 = vpack.c.b16 %v745, %v743
    %778 = vmatprep.subr.bf16.mxu0 %v761
    %779 = vmatpush1.bf16.msra.mxu0 %v760
    %780 = vmatprep.subr.bf16.mxu0 %v759
    %781 = vmatpush1.bf16.msra.mxu0 %v758
    %782 = vmatprep.subr.bf16.mxu0 %v757
    %783 = vmatpush1.bf16.msra.mxu0 %v756
    %784 = vmatprep.subr.bf16.mxu0 %v755
    %785 = vmatpush1.bf16.msra.mxu0 %v754
    %786 = vmatprep.subr.bf16.mxu0 %v753
    %787 = vmatpush1.bf16.msra.mxu0 %v752
    %788 = vmatprep.subr.bf16.mxu0 %v751
    %789 = vmatpush1.bf16.msra.mxu0 %v750
    %790 = vmatprep.subr.bf16.mxu0 %v749
    %791 = vmatpush1.bf16.msra.mxu0 %v748
    %792 = vmatprep.subr.bf16.mxu0 %v747
    %793 = vmatpush1.bf16.msra.mxu0 %v746
    %794 = vmatprep.subr.bf16.mxu0 0
    %795 = vmatpush2.bf16.msra.mxu0 0
    %796 = vmatprep.subr.bf16.mxu0 0
    %797 = vmatpush2.bf16.msra.mxu0 0
    %798 = vmatprep.subr.bf16.mxu0 0
    %799 = vmatpush2.bf16.msra.mxu0 0
    %800 = vmatprep.subr.bf16.mxu0 0
    %801 = vmatpush2.bf16.msra.mxu0 0
    %802 = vmatprep.subr.bf16.mxu0 0
    %803 = vmatpush2.bf16.msra.mxu0 0
    %804 = vmatprep.subr.bf16.mxu0 0
    %805 = vmatpush2.bf16.msra.mxu0 0
    %806 = vmatprep.subr.bf16.mxu0 0
    %807 = vmatpush2.bf16.msra.mxu0 0
    %808 = vmatprep.subr.bf16.mxu0 0
    %809 = vmatpush2.bf16.msra.mxu0 0
    %810 = vmatprep.mubr.bf16.mxu0 0
    %811 = vmatmul.mubr.bf16.gmra.mxu0 %v669
    %v812 = vpop.f32.mrf.mxu0
    %v813 = vadd.f32 %v691, %v812
    %v814 = vpop.f32.mrf.mxu0
    %v815 = vadd.f32 %v695, %v814
    %v816 = vpop.f32.mrf.mxu0
    %v817 = vadd.f32 %v691, %v816
    %v818 = vpop.f32.mrf.mxu0
    %v819 = vadd.f32 %v695, %v818
    %820 = vdwg.mxu0
    %v821 = vmul.f32 %v813, %v813
    %v822 = vmul.f32 %v815, %v815
    %v823 = vmul.f32 %v817, %v817
    %v824 = vmul.f32 %v819, %v819
    %v825 = vmul.f32 %v813, %v821
    %v826 = vmul.f32 %v815, %v822
    %v827 = vmul.f32 %v817, %v823
    %v828 = vmul.f32 %v819, %v824
    %v829 = vmul.f32 %v825, 0.044715
    %v830 = vmul.f32 %v826, 0.044715
    %v831 = vmul.f32 %v827, 0.044715
    %v832 = vmul.f32 %v828, 0.044715
    %v833 = vadd.f32 %v813, %v829
    %v834 = vadd.f32 %v815, %v830
    %v835 = vadd.f32 %v817, %v831
    %v836 = vadd.f32 %v819, %v832
    %v837 = vmul.f32 %v833, 0.7978846
    %v838 = vmul.f32 %v834, 0.7978846
    %v839 = vmul.f32 %v835, 0.7978846
    %v840 = vmul.f32 %v836, 0.7978846
    %v841 = vtanh.pop %v837
    %v842 = vtanh.pop %v838
    %v843 = vtanh.pop %v839
    %v844 = vtanh.pop %v840
    %v845 = vadd.f32 %v841, 1.0
    %v846 = vadd.f32 %v842, 1.0
    %v847 = vadd.f32 %v843, 1.0
    %v848 = vadd.f32 %v844, 1.0
    %v849 = vmul.f32 %v845, 0.5
    %v850 = vmul.f32 %v846, 0.5
    %v851 = vmul.f32 %v847, 0.5
    %v852 = vmul.f32 %v848, 0.5
    %v853 = vmul.f32 %v813, %v849
    %v854 = vmul.f32 %v815, %v850
    %v855 = vmul.f32 %v817, %v851
    %v856 = vmul.f32 %v819, %v852
    %v857 = vpack.c.bf16 %v855, %v853
    %v858 = vpack.c.bf16 %v856, %v854
    %v859 = vld [vmem:[#allocation10] sm:$0xf]
    %v860 = vld [vmem:[#allocation10 + $0x4] sm:$0xf]
    %v861 = vld [vmem:[#allocation10 + $0x8] sm:$0xf]
    %v862 = vld [vmem:[#allocation10 + $0xc] sm:$0xf]
    %v863 = vld [vmem:[#allocation10 + $0x10] sm:$0xf]
    %v864 = vld [vmem:[#allocation10 + $0x14] sm:$0xf]
    %v865 = vld [vmem:[#allocation10 + $0x18] sm:$0xf]
    %v866 = vld [vmem:[#allocation10 + $0x1c] sm:$0xf]
    %v867 = vld [vmem:[#allocation10 + $0x20] sm:$0xf]
    %v868 = vld [vmem:[#allocation10 + $0x24] sm:$0xf]
    %v869 = vld [vmem:[#allocation10 + $0x28] sm:$0xf]
    %v870 = vld [vmem:[#allocation10 + $0x2c] sm:$0xf]
    %v871 = vld [vmem:[#allocation10 + $0x30] sm:$0xf]
    %v872 = vld [vmem:[#allocation10 + $0x34] sm:$0xf]
    %v873 = vld [vmem:[#allocation10 + $0x38] sm:$0xf]
    %v874 = vld [vmem:[#allocation10 + $0x3c] sm:$0xf]
    %v875 = vld [vmem:[#allocation10 + $0x40] sm:$0xf]
    %v876 = vld [vmem:[#allocation10 + $0x44] sm:$0xf]
    %v877 = vld [vmem:[#allocation10 + $0x48] sm:$0xf]
    %v878 = vld [vmem:[#allocation10 + $0x4c] sm:$0xf]
    %v879 = vld [vmem:[#allocation10 + $0x50] sm:$0xf]
    %v880 = vld [vmem:[#allocation10 + $0x54] sm:$0xf]
    %v881 = vld [vmem:[#allocation10 + $0x58] sm:$0xf]
    %v882 = vld [vmem:[#allocation10 + $0x5c] sm:$0xf]
    %v883 = vld [vmem:[#allocation10 + $0x60] sm:$0xf]
    %v884 = vld [vmem:[#allocation10 + $0x64] sm:$0xf]
    %v885 = vld [vmem:[#allocation10 + $0x68] sm:$0xf]
    %v886 = vld [vmem:[#allocation10 + $0x6c] sm:$0xf]
    %v887 = vld [vmem:[#allocation10 + $0x70] sm:$0xf]
    %v888 = vld [vmem:[#allocation10 + $0x74] sm:$0xf]
    %v889 = vld [vmem:[#allocation10 + $0x78] sm:$0xf]
    %v890 = vld [vmem:[#allocation10 + $0x7c] sm:$0xf]
    %v891 = vld [vmem:[%s14] sm:$0x1]
    %v893 = vlaneseq
    %v894 = vshrl.u32 %v893, 7
    %v895 = vsub.s32 0, %v894
    %v896 = vrot.slane %v891, %v895
    %v930 = vunpack.c.l.b16 %v859
    %v931 = vunpack.c.l.b16 %v860
    %v932 = vunpack.c.l.b16 %v861
    %v933 = vunpack.c.l.b16 %v862
    %v934 = vunpack.c.l.b16 %v863
    %v935 = vunpack.c.l.b16 %v864
    %v936 = vunpack.c.l.b16 %v865
    %v937 = vunpack.c.l.b16 %v866
    %v938 = vunpack.c.l.b16 %v867
    %v939 = vunpack.c.l.b16 %v868
    %v940 = vunpack.c.l.b16 %v869
    %v941 = vunpack.c.l.b16 %v870
    %v942 = vunpack.c.l.b16 %v871
    %v943 = vunpack.c.l.b16 %v872
    %v944 = vunpack.c.l.b16 %v873
    %v945 = vunpack.c.l.b16 %v874
    %v946 = vunpack.c.l.b16 %v875
    %v947 = vunpack.c.l.b16 %v876
    %v948 = vunpack.c.l.b16 %v877
    %v949 = vunpack.c.l.b16 %v878
    %v950 = vunpack.c.l.b16 %v879
    %v951 = vunpack.c.l.b16 %v880
    %v952 = vunpack.c.l.b16 %v881
    %v953 = vunpack.c.l.b16 %v882
    %v954 = vunpack.c.l.b16 %v883
    %v955 = vunpack.c.l.b16 %v884
    %v956 = vunpack.c.l.b16 %v885
    %v957 = vunpack.c.l.b16 %v886
    %v958 = vunpack.c.l.b16 %v887
    %v959 = vunpack.c.l.b16 %v888
    %v960 = vunpack.c.l.b16 %v889
    %v961 = vunpack.c.l.b16 %v890
    %v962 = vpack.c.b16 %v931, %v930
    %v963 = vpack.c.b16 %v933, %v932
    %v964 = vpack.c.b16 %v935, %v934
    %v965 = vpack.c.b16 %v937, %v936
    %v966 = vpack.c.b16 %v939, %v938
    %v967 = vpack.c.b16 %v941, %v940
    %v968 = vpack.c.b16 %v943, %v942
    %v969 = vpack.c.b16 %v945, %v944
    %v970 = vpack.c.b16 %v947, %v946
    %v971 = vpack.c.b16 %v949, %v948
    %v972 = vpack.c.b16 %v951, %v950
    %v973 = vpack.c.b16 %v953, %v952
    %v974 = vpack.c.b16 %v955, %v954
    %v975 = vpack.c.b16 %v957, %v956
    %v976 = vpack.c.b16 %v959, %v958
    %v977 = vpack.c.b16 %v961, %v960
    %994 = vmatprep.subr.bf16.mxu0 0
    %995 = vmatpush1.bf16.msra.mxu0 %v969
    %996 = vmatprep.subr.bf16.mxu0 0
    %997 = vmatpush1.bf16.msra.mxu0 %v968
    %998 = vmatprep.subr.bf16.mxu0 0
    %999 = vmatpush1.bf16.msra.mxu0 %v967
    %1000 = vmatprep.subr.bf16.mxu0 0
    %1001 = vmatpush1.bf16.msra.mxu0 %v966
    %1002 = vmatprep.subr.bf16.mxu0 0
    %1003 = vmatpush1.bf16.msra.mxu0 %v965
    %1004 = vmatprep.subr.bf16.mxu0 0
    %1005 = vmatpush1.bf16.msra.mxu0 %v964
    %1006 = vmatprep.subr.bf16.mxu0 0
    %1007 = vmatpush1.bf16.msra.mxu0 %v963
    %1008 = vmatprep.subr.bf16.mxu0 0
    %1009 = vmatpush1.bf16.msra.mxu0 %v962
    %1010 = vmatprep.subr.bf16.mxu0 0
    %1011 = vmatpush2.bf16.msra.mxu0 %v977
    %1012 = vmatprep.subr.bf16.mxu0 0
    %1013 = vmatpush2.bf16.msra.mxu0 %v976
    %1014 = vmatprep.subr.bf16.mxu0 0
    %1015 = vmatpush2.bf16.msra.mxu0 %v975
    %1016 = vmatprep.subr.bf16.mxu0 0
    %1017 = vmatpush2.bf16.msra.mxu0 %v974
    %1018 = vmatprep.subr.bf16.mxu0 0
    %1019 = vmatpush2.bf16.msra.mxu0 %v973
    %1020 = vmatprep.subr.bf16.mxu0 0
    %1021 = vmatpush2.bf16.msra.mxu0 %v972
    %1022 = vmatprep.subr.bf16.mxu0 0
    %1023 = vmatpush2.bf16.msra.mxu0 %v971
    %1024 = vmatprep.subr.bf16.mxu0 0
    %1025 = vmatpush2.bf16.msra.mxu0 %v970
    %1026 = vmatprep.mubr.bf16.mxu0 %v858
    %1027 = vmatmul.mubr.bf16.gmra.mxu0 %v857
    %v1028 = vpop.f32.mrf.mxu0
    %v1029 = vadd.f32 %v896, %v1028
    %v1030 = vpop.f32.mrf.mxu0
    %v1031 = vpop.f32.mrf.mxu0
    %v1032 = vadd.f32 %v896, %v1031
    %v1033 = vpop.f32.mrf.mxu0
    %1034 = vdwg.mxu0
    %v1035 = vadd.f32 %v667, %v1029
    %v1036 = vadd.f32 %v668, %v1032
    %v1037 = vld [vmem:[%s15] sm:$0x1]
    %v1038 = vld [vmem:[%s16] sm:$0x1]
    %1039 = vadd.xlane.f32.xlu0 %v1035
    %v1040 = vpop.xlane.xlu0 %1039
    %1041 = vadd.xlane.f32.xlu0 %v1036
    %v1042 = vpop.xlane.xlu0 %1041
    %v1043 = vmul.f32 %v1040, %v630
    %v1044 = vmul.f32 %v1042, %v630
    %v1045 = vmul.f32 %v1035, %v1035
    %v1046 = vmul.f32 %v1036, %v1036
    %1047 = vadd.xlane.f32.xlu0 %v1045
    %v1048 = vpop.xlane.xlu0 %1047
    %1049 = vadd.xlane.f32.xlu0 %v1046
    %v1050 = vpop.xlane.xlu0 %1049
    %v1051 = vmul.f32 %v1048, %v630
    %v1052 = vmul.f32 %v1050, %v630
    %v1053 = vmul.f32 %v1043, %v1043
    %v1054 = vmul.f32 %v1044, %v1044
    %v1055 = vsub.f32 %v1051, %v1053
    %v1056 = vsub.f32 %v1052, %v1054
    %v1057 = vsub.f32 %v1035, %v1043
    %v1058 = vsub.f32 %v1036, %v1044
    %v1059 = vadd.f32 %v1055, 1e-05
    %v1060 = vadd.f32 %v1056, 1e-05
    %v1061 = vrsqrt.pop %v1059
    %v1062 = vrsqrt.pop %v1060
    %v1063 = vmul.f32 %v1057, %v1061
    %v1064 = vmul.f32 %v1058, %v1062
    %v1066 = vlaneseq
    %v1067 = vshrl.u32 %v1066, 7
    %v1068 = vsub.s32 0, %v1067
    %v1069 = vrot.slane %v1037, %v1068
    %v1071 = vmul.f32 %v1063, %v1069
    %v1072 = vmul.f32 %v1064, %v1069
    %v1074 = vlaneseq
    %v1075 = vshrl.u32 %v1074, 7
    %v1076 = vsub.s32 0, %v1075
    %v1077 = vrot.slane %v1038, %v1076
    %v1079 = vadd.f32 %v1071, %v1077
    %v1080 = vadd.f32 %v1072, %v1077
    %v1081 = vld [vmem:[%s2] sm:$0xff]
    %v1082 = vld [vmem:[%s2 + $0x8] sm:$0xff]
    %1084 = vset.pattern.permute.xlu0 0
    %1085 = vperm.xlu0 %1084, %v1081
    %v1086 = vpop.permute.xlu0 %1085
    %1089 = vset.pattern.permute.xlu0 0
    %1090 = vperm.xlu0 %1089, %v1082
    %v1091 = vpop.permute.xlu0 %1090
    %v1093 = vmul.f32 %v1079, %v1086
    %v1094 = vmul.f32 %v1080, %v1091
    %v1095 = vrot.slane %v1093, 4
    %v1096 = vadd.f32 %v1093, %v1095
    %v1097 = vrot.slane %v1096, 2
    %v1098 = vadd.f32 %v1096, %v1097
    %v1099 = vrot.slane %v1098, 1
    %v1100 = vadd.f32 %v1098, %v1099
    %v1101 = vrot.slane %v1094, 4
    %v1102 = vadd.f32 %v1094, %v1101
    %v1103 = vrot.slane %v1102, 2
    %v1104 = vadd.f32 %v1102, %v1103
    %v1105 = vrot.slane %v1104, 1
    %v1106 = vadd.f32 %v1104, %v1105
    %vm1109 = vcmask 1041409
    %v1110 = vsel %vm1109, %v1106, %v1100
    %1112 = vst [vmem:[#allocation11] sm:$0x3] %v1110
    // Predicated region
    $region90: #{tpu_custom_call.1} parent=1 // pred_check
      _
    $region91: #{tpu_custom_call.1} parent=1 // pred_check_branch
      %1114 = sbr.rel (0) target = $region93
    $region92: #{tpu_custom_call.1} parent=1 // pred_region
      %s1116 = ssub.s32 32, 32
      %1117 = vsyncadd [#allocation4], %s1116
      %s1119 = sshll.u32 [#allocation11], 4
      %s1120 = int_to_ptr.vmem [resolvable:$true] %s1119
      %1122 = dma.vmem_to_hbm [thread:$0]  %s1120, 32, %s17, [#allocation4]
    $region93: #{tpu_custom_call.1} parent=1 // pred_fallthru
      _
    // Predicated region
    $region94: #{tpu_custom_call.1} parent=1 // pred_check
      _
    $region95: #{tpu_custom_call.1} parent=1 // pred_check_branch
      %1124 = sbr.rel (0) target = $region97
    $region96: #{tpu_custom_call.1} parent=1 // pred_region
      %1125 = dma.done [#allocation4], 32
    $region97: #{tpu_custom_call.1} parent=1 // pred_fallthru
      _
    %1126 = vsyncpa [#allocation3], 1
    %1127 = vsyncpa [#allocation6], 1
    %1128 = vsyncpa [#allocation9], 1
    %1129 = vsyncpa [#allocation4], 1

</llo_original>
